<compile_context>
chip_gen: v6e
topology: v6e:2x2x1
jax: 0.10.0
libtpu: 0.0.40
codegen_flags: <defaults>
</compile_context>

<pallas_src>
import functools

import jax
import jax.numpy as jnp
from jax import lax
from jax.experimental import pallas as pl
from jax.experimental.pallas import tpu as pltpu

_MIB = 1024 * 1024


def _round_up(x, m):
    return (x + m - 1) // m * m


def _vmem_capacity_bytes():
    try:
        return int(pltpu.get_tpu_info().vmem_capacity_bytes)
    except Exception:
        return 64 * _MIB  # conservative default (v7x per-core); v5e/v6e have 128 MiB


# -----------------------------------------------------------------------------
# VMEM footprint estimate for one stage (worst case: residual-fused stage),
# used both to pick (t_tile, co_tile, conv strategy) and to set vmem_limit.
# -----------------------------------------------------------------------------
def _stage_footprint_bytes(*, t_tile, halo_blk, cin_pad, co_tile, k_taps,
                           use_im2col, cin0_pad, has_res):
    b = 2  # bf16 bytes
    f = 2 * t_tile * cin_pad * b              # main input tile (double-buffered)
    f += 2 * 2 * halo_blk * cin_pad * b       # prev/next halo blocks
    f += 2 * k_taps * cin_pad * co_tile * b   # folded conv weight block
    f += 2 * co_tile * 4                      # shift (f32)
    f += 2 * t_tile * co_tile * b             # output tile
    f += (t_tile + 2 * halo_blk) * cin_pad * b  # in-kernel window concat
    f += t_tile * co_tile * 4                 # f32 accumulator
    if use_im2col:
        f += t_tile * k_taps * cin_pad * b    # im2col slab (largest live object)
    else:
        f += 2 * t_tile * cin_pad * b         # transient shifted-slice copies (est.)
    if has_res:
        f += 2 * t_tile * cin0_pad * b        # residual input tile
        f += 2 * cin0_pad * co_tile * b       # residual 1x1 weight
    return f


def _select_tiling(*, n, t, halo_blk, cin_pad, cin0_pad, cout_pad, k_taps,
                   t_tile_target, vmem_budget):
    t_cap = _round_up(t, halo_blk)

    co_cands = []
    for c in (cout_pad, 512, 384, 256, 128):
        if c <= cout_pad and cout_pad % c == 0 and c % 128 == 0 and c not in co_cands:
            co_cands.append(c)

    t_cands = []
    tt = min(_round_up(t_tile_target, halo_blk), t_cap)
    while True:
        tt = max(halo_blk, (tt // halo_blk) * halo_blk)
        if tt not in t_cands:
            t_cands.append(tt)
        if tt == halo_blk:
            break
        tt //= 2

    choice = (t_cands[-1], co_cands[-1], False)   # smallest fallback
    done = False
    for tt in t_cands:                    # prefer large time tiles (amortize overhead)
        for co in co_cands:               # then wide/one-shot Cout tiles (fewer input re-reads)
            for use_im2col in (True, False):   # fall back to K matmuls if slab too big
                fp = _stage_footprint_bytes(
                    t_tile=tt, halo_blk=halo_blk, cin_pad=cin_pad,
                    co_tile=co, k_taps=k_taps, use_im2col=use_im2col,
                    cin0_pad=cin0_pad, has_res=True)
                if fp <= vmem_budget:
                    choice = (tt, co, use_im2col)
                    done = True
                    break
            if done:
                break
        if done:
            break

    t_tile, co_tile, use_im2col = choice
    # v7x has 2 TensorCores: make sure at least one parallel grid axis has
    # extent >= 2 for small-batch / single-Cout-tile calls.
    if n == 1 and cout_pad // co_tile == 1 and -(-t // t_tile) == 1 and t > halo_blk:
        t_tile = max(halo_blk, _round_up(-(-t // 2), halo_blk))
        if t_tile >= t:
            t_tile = max(halo_blk, t_tile - halo_blk)
    return t_tile, co_tile, use_im2col


# -----------------------------------------------------------------------------
# Fused stage kernel: conv1d + folded-BN shift + optional fused residual 1x1
# conv + ReLU, with time tiling and halo blocks.
#
# Grid: (num_cout_tiles, N, num_time_tiles) -- all parallel. Cout outermost so
# the folded weight block is DMA'd once per stage.
# -----------------------------------------------------------------------------
def _stage_kernel(xp_ref, xm_ref, xn_ref, w_ref, sh_ref, *rest,
                  k_taps, dilation, conv_pad, t_tile, halo_blk, t_real,
                  has_residual, use_im2col, mask_tail):
    if has_residual:
        xr_ref, wr_ref, o_ref = rest
    else:
        (o_ref,) = rest

    t_idx = pl.program_id(2)
    num_t = pl.num_programs(2)
    cin_pad = xm_ref.shape[2]

    # Boundary-only halo masking: interior tiles need no masking at all (frame
    # tail rows and padded channels are exact zeros by construction); only the
    # clamped first/last halo blocks carry stale rows that must read as the
    # conv's zero padding.
    xp = jnp.where(t_idx == 0, jnp.zeros_like(xp_ref[0]), xp_ref[0])
    xn = jnp.where(t_idx == num_t - 1, jnp.zeros_like(xn_ref[0]), xn_ref[0])
    win = jnp.concatenate([xp, xm_ref[0], xn], axis=0)

    base = halo_blk - conv_pad
    if use_im2col:
        # One lane-dense (T_TILE, K*Cin_pad) slab -> single wide MXU matmul.
        cols = jnp.concatenate(
            [win[base + k * dilation: base + k * dilation + t_tile, :]
             for k in range(k_taps)], axis=1)
        acc = jnp.dot(cols, w_ref[...], preferred_element_type=jnp.float32)
    else:
        # VMEM-lean variant: K accumulated matmuls over shifted window slices
        # (no K*Cin_pad-wide im2col slab kept live).
        w = w_ref[...]
        acc = jnp.dot(win[base: base + t_tile, :], w[:cin_pad, :],
                      preferred_element_type=jnp.float32)
        for k in range(1, k_taps):
            acc = acc + jnp.dot(
                win[base + k * dilation: base + k * dilation + t_tile, :],
                w[k * cin_pad:(k + 1) * cin_pad, :],
                preferred_element_type=jnp.float32)

    # Fused residual branch (1x1 conv + BN on the block input), added pre-ReLU.
    if has_residual:
        acc = acc + jnp.dot(xr_ref[0], wr_ref[...],
                            preferred_element_type=jnp.float32)

    y = jnp.maximum(acc + sh_ref[...], 0.0)   # folded bias/BN shift + ReLU
                                              # (Dropout is identity in eval mode)

    if mask_tail:
        # Only the last time tile holds frame-tail rows; keep them exact zero
        # so the next stage's halo reads are clean. Interior tiles store with
        # a plain lane-dense vst (no iota/select pass).
        @pl.when(t_idx != num_t - 1)
        def _():
            o_ref[0] = y.astype(o_ref.dtype)

        @pl.when(t_idx == num_t - 1)
        def _():
            r = t_idx * t_tile + lax.broadcasted_iota(jnp.int32, (t_tile, 1), 0)
            o_ref[0] = jnp.where(r < t_real, y, 0.0).astype(o_ref.dtype)
    else:
        o_ref[0] = y.astype(o_ref.dtype)


# -----------------------------------------------------------------------------
# One fused Conv1d+BN(+fused residual)+ReLU stage on padded NTC frames.
# -----------------------------------------------------------------------------
def _run_stage(x_frame, w_mat, shift, *, k_taps, dilation, conv_pad,
               t_tile, halo_blk, t_real, cout_pad, co_tile, use_im2col,
               vmem_limit, x_res=None, w_res=None):
    n, tf, cin_pad = x_frame.shape
    num_t = tf // t_tile
    num_co = cout_pad // co_tile
    blocks_per_tile = t_tile // halo_blk
    last_h_blk = tf // halo_blk - 1
    has_res = x_res is not None
    mask_tail = tf > t_real

    in_specs = [
        # prev-halo / main / next-halo views of the same frame (non-overlapping
        # blocked DMAs; boundary blocks are clamped and masked in-kernel).
        pl.BlockSpec((1, halo_blk, cin_pad),
                     lambda co, n_, t: (n_, jnp.maximum(t * blocks_per_tile - 1, 0), 0)),
        pl.BlockSpec((1, t_tile, cin_pad),
                     lambda co, n_, t: (n_, t, 0)),
        pl.BlockSpec((1, halo_blk, cin_pad),
                     lambda co, n_, t: (n_, jnp.minimum((t + 1) * blocks_per_tile,
                                                        last_h_blk), 0)),
        # Cout-tile is the OUTERMOST grid axis -> each weight/shift block is
        # fetched once per stage, not once per batch element / time tile.
        pl.BlockSpec((k_taps * cin_pad, co_tile), lambda co, n_, t: (0, co)),
        pl.BlockSpec((1, co_tile), lambda co, n_, t: (0, co)),
    ]
    args = [x_frame, x_frame, x_frame, w_mat, shift]
    if has_res:
        cin0_pad = x_res.shape[2]
        in_specs.append(pl.BlockSpec((1, t_tile, cin0_pad),
                                     lambda co, n_, t: (n_, t, 0)))
        in_specs.append(pl.BlockSpec((cin0_pad, co_tile),
                                     lambda co, n_, t: (0, co)))
        args += [x_res, w_res]

    kernel = functools.partial(
        _stage_kernel, k_taps=k_taps, dilation=dilation, conv_pad=conv_pad,
        t_tile=t_tile, halo_blk=halo_blk, t_real=t_real,
        has_residual=has_res, use_im2col=use_im2col, mask_tail=mask_tail)

    # Advisory cost estimate so XLA schedules the chained stages sensibly.
    flops = 2 * n * tf * k_taps * cin_pad * cout_pad
    bytes_acc = (num_co * n * tf * cin_pad * 2       # input (re-read per Cout tile)
                 + k_taps * cin_pad * cout_pad * 2   # weights (fetched once)
                 + n * tf * cout_pad * 2             # output
                 + cout_pad * 4)                     # shift
    if has_res:
        cin0_pad = x_res.shape[2]
        flops += 2 * n * tf * cin0_pad * cout_pad
        bytes_acc += num_co * n * tf * cin0_pad * 2 + cin0_pad * cout_pad * 2

    return pl.pallas_call(
        kernel,
        out_shape=jax.ShapeDtypeStruct((n, tf, cout_pad), jnp.bfloat16),
        grid=(num_co, n, num_t),
        in_specs=in_specs,
        out_specs=pl.BlockSpec((1, t_tile, co_tile),
                               lambda co, n_, t: (n_, t, co)),
        compiler_params=pltpu.CompilerParams(
            dimension_semantics=("parallel", "parallel", "parallel"),
            vmem_limit_bytes=vmem_limit),
        cost_estimate=pl.CostEstimate(flops=int(flops), transcendentals=0,
                                      bytes_accessed=int(bytes_acc)),
    )(*args)


# -----------------------------------------------------------------------------
# Fold conv bias + eval-mode BatchNorm into the conv weights.
#   w : (Cout, Cin, K) PyTorch Conv1d layout
# Returns:
#   w_mat : (K*cin_pad, cout_pad) bf16, BN scale folded in, channels zero-padded
#   shift : (1, cout_pad) f32
# -----------------------------------------------------------------------------
def _fold_stage(w, b, gamma, beta, mean, var, *, eps, cin_pad, cout_pad):
    cout, cin, k = w.shape
    scale = gamma / jnp.sqrt(var + eps)                         # (Cout,)
    shift = beta - mean * scale + b * scale                     # (Cout,)
    w_scaled = w * scale[:, None, None]                         # (Cout, Cin, K)
    w_kic = jnp.transpose(w_scaled, (2, 1, 0))                  # (K, Cin, Cout)
    w_kic = jnp.pad(w_kic, ((0, 0), (0, cin_pad - cin), (0, cout_pad - cout)))
    w_mat = w_kic.reshape(k * cin_pad, cout_pad).astype(jnp.bfloat16)
    shift = jnp.pad(shift, (0, cout_pad - cout)).reshape(1, cout_pad)
    return w_mat, shift.astype(jnp.float32)


# -----------------------------------------------------------------------------
# JasperBlock forward (eval mode).
#   x_nct : (N, C_in, T)  -- PyTorch NCT layout
# -----------------------------------------------------------------------------
def jasper_block(x_nct, params, *, kernel_size, dilation=1, stride=1,
                 eps=1e-5, t_tile_target=512):
    # TODO(synk): stride > 1 and training-mode BatchNorm/Dropout not implemented.
    assert stride == 1, "stride > 1 not implemented"
    conv_pad = kernel_size * dilation // 2   # exactly the PyTorch module's padding
    # The PyTorch module's residual add only shape-checks when each conv keeps
    # the sequence length T, i.e. 2*pad == dilation*(kernel_size-1) (odd K, d=1).
    assert 2 * conv_pad == dilation * (kernel_size - 1), (
        "only length-preserving configs (odd kernel_size, dilation == 1) are supported")

    n, c_in, t = x_nct.shape
    subs = params["submodules"]
    resp = params["residual"]
    c_out = subs[0]["w"].shape[0]

    halo = (kernel_size - 1) * dilation
    halo_blk = max(8, _round_up(max(halo, 1), 8))              # sublane-aligned
    cin0_pad = _round_up(c_in, 128)
    cout_pad = _round_up(c_out, 128)
    cin_max = max(cin0_pad, cout_pad)

    # Generation-aware tile budgeting (v5e/v6e: 128 MiB VMEM, v7x: 64 MiB).
    cap = _vmem_capacity_bytes()
    budget = max(24 * _MIB, min(int(cap * 0.5), 64 * _MIB))
    t_tile, co_tile, use_im2col = _select_tiling(
        n=n, t=t, halo_blk=halo_blk, cin_pad=cin_max, cin0_pad=cin0_pad,
        cout_pad=cout_pad, k_taps=kernel_size,
        t_tile_target=t_tile_target, vmem_budget=budget)
    num_t = -(-t // t_tile)
    tf = num_t * t_tile                                        # frame time length
    fp = _stage_footprint_bytes(
        t_tile=t_tile, halo_blk=halo_blk, cin_pad=cin_max, co_tile=co_tile,
        k_taps=kernel_size, use_im2col=use_im2col, cin0_pad=cin0_pad,
        has_res=True)
    vmem_limit = int(min(max(cap - 4 * _MIB, 32 * _MIB),
                         max(32 * _MIB, 2 * fp + 8 * _MIB)))

    # Single entry pad: NCT -> bf16 NTC frame (N, TF, Cin_pad); tail rows and
    # padded channels are exact zeros (all boundary handling relies on this).
    x = jnp.transpose(x_nct, (0, 2, 1))
    x = jnp.pad(x, ((0, 0), (0, tf - t), (0, cin0_pad - c_in)))
    x_frame = x.astype(jnp.bfloat16)

    # Fold conv bias + BatchNorm (eval) into weights / shifts, pad channels.
    folded = []
    for i, sp in enumerate(subs):
        cin_p = cin0_pad if i == 0 else cout_pad
        folded.append(_fold_stage(sp["w"], sp["b"], sp["gamma"], sp["beta"],
                                  sp["mean"], sp["var"], eps=eps,
                                  cin_pad=cin_p, cout_pad=cout_pad))
    w_res, shift_res = _fold_stage(resp["w"], resp["b"], resp["gamma"],
                                   resp["beta"], resp["mean"], resp["var"],
                                   eps=eps, cin_pad=cin0_pad, cout_pad=cout_pad)

    common = dict(k_taps=kernel_size, dilation=dilation, conv_pad=conv_pad,
                  t_tile=t_tile, halo_blk=halo_blk, t_real=t,
                  cout_pad=cout_pad, co_tile=co_tile, use_im2col=use_im2col,
                  vmem_limit=vmem_limit)

    h = x_frame
    for w_mat, shift in folded[:-1]:
        h = _run_stage(h, w_mat, shift, **common)
    w_mat, shift = folded[-1]
    out = _run_stage(h, w_mat, shift + shift_res,
                     x_res=x_frame, w_res=w_res, **common)

    # Exit: slice padding away, transpose in bf16 (halves epilogue traffic),
    # then cast to f32 for dtype parity with the PyTorch module's output.
    return jnp.transpose(out[:, :t, :c_out], (0, 2, 1)).astype(jnp.float32)


# -----------------------------------------------------------------------------
# Pure-JAX f32 reference (lax.conv) for correctness checking.
# -----------------------------------------------------------------------------
def _ref_conv_bn_act(x_nct, p, *, padding, dilation, residual=None,
                     apply_relu=True, eps=1e-5):
    y = lax.conv_general_dilated(
        x_nct, p["w"], window_strides=(1,), padding=[(padding, padding)],
        rhs_dilation=(dilation,), dimension_numbers=("NCH", "OIH", "NCH"))
    y = y + p["b"][None, :, None]
    scale = p["gamma"] / jnp.sqrt(p["var"] + eps)
    y = (y - p["mean"][None, :, None]) * scale[None, :, None] + p["beta"][None, :, None]
    if residual is not None:
        y = y + residual
    if apply_relu:
        y = jnp.maximum(y, 0.0)
    return y


def _ref_jasper_block(x_nct, params, *, kernel_size, dilation=1):
    pad = kernel_size * dilation // 2
    res = _ref_conv_bn_act(x_nct, params["residual"], padding=0, dilation=1,
                           apply_relu=False)
    h = x_nct
    for sp in params["submodules"][:-1]:
        h = _ref_conv_bn_act(h, sp, padding=pad, dilation=dilation,
                             apply_relu=True)
    sp = params["submodules"][-1]
    return _ref_conv_bn_act(h, sp, padding=pad, dilation=dilation,
                            residual=res, apply_relu=True)


# -----------------------------------------------------------------------------
# Deterministic parameter construction.
# -----------------------------------------------------------------------------
def _make_stage_params(key, c_in, c_out, k):
    ks = jax.random.split(key, 6)
    return {
        "w": 0.2 * jax.random.normal(ks[0], (c_out, c_in, k), jnp.float32),
        "b": 0.1 * jax.random.normal(ks[1], (c_out,), jnp.float32),
        "gamma": 1.0 + 0.1 * jax.random.normal(ks[2], (c_out,), jnp.float32),
        "beta": 0.1 * jax.random.normal(ks[3], (c_out,), jnp.float32),
        "mean": 0.1 * jax.random.normal(ks[4], (c_out,), jnp.float32),
        "var": jax.random.uniform(ks[5], (c_out,), jnp.float32, 0.5, 1.5),
    }


def make_jasper_params(key, submodules_num, c_in, c_out, kernel_size):
    keys = jax.random.split(key, submodules_num + 1)
    subs = []
    for i in range(submodules_num):
        subs.append(_make_stage_params(
            keys[i], c_in if i == 0 else c_out, c_out, kernel_size))
    res = _make_stage_params(keys[-1], c_in, c_out, 1)
    return {"submodules": subs, "residual": res}


if __name__ == "__main__":
    # Small shapes: batch=2, in_channels=4, out_channels=8, T=16,
    # kernel_size=3, dilation=1, submodules_num=3.
    N, C_IN, C_OUT, T = 2, 4, 8, 16
    KERNEL_SIZE, DILATION, SUBMODULES = 3, 1, 3

    key = jax.random.PRNGKey(0)
    kx, kp = jax.random.split(key)
    x = jax.random.normal(kx, (N, C_IN, T), jnp.float32)  # PyTorch NCT layout
    params = make_jasper_params(kp, SUBMODULES, C_IN, C_OUT, KERNEL_SIZE)

    fwd = jax.jit(functools.partial(jasper_block, kernel_size=KERNEL_SIZE,
                                    dilation=DILATION))
    out = jax.block_until_ready(fwd(x, params))

    ref = jax.block_until_ready(
        _ref_jasper_block(x, params, kernel_size=KERNEL_SIZE, dilation=DILATION))

    assert out.shape == (N, C_OUT, T), out.shape
    # bf16 activations/weights vs f32 reference -> loose tolerance.
    assert jnp.allclose(out, ref, atol=5e-2, rtol=5e-2), float(
        jnp.max(jnp.abs(out - ref)))

    print("KERNEL_OK")
</pallas_src>

<mosaic_0001>
module attributes {stable_mosaic.version = 11 : i64} {
  func.func @_stage_kernel(%arg0: i32, %arg1: i32, %arg2: i32, %arg3: memref<1x8x128xbf16, #tpu.memory_space<vmem>>, %arg4: memref<1x16x128xbf16, #tpu.memory_space<vmem>>, %arg5: memref<1x8x128xbf16, #tpu.memory_space<vmem>>, %arg6: memref<384x128xbf16, #tpu.memory_space<vmem>>, %arg7: memref<1x128xf32, #tpu.memory_space<vmem>>, %arg8: memref<1x16x128xbf16, #tpu.memory_space<vmem>>) attributes {dimension_semantics = [#tpu.dimension_semantics<parallel>, #tpu.dimension_semantics<parallel>, #tpu.dimension_semantics<parallel>], iteration_bounds = array<i64: 1, 2, 1>, scalar_prefetch = 0 : i64, scratch_operands = 0 : i64, tpu.core_type = #tpu.core_type<tc>, window_params = [{transform_indices = @transform_0, window_bounds = array<i64: 1, 8, 128>}, {transform_indices = @transform_1, window_bounds = array<i64: 1, 16, 128>}, {transform_indices = @transform_2, window_bounds = array<i64: 1, 8, 128>}, {transform_indices = @transform_3, window_bounds = array<i64: 384, 128>}, {transform_indices = @transform_4, window_bounds = array<i64: 1, 128>}, {transform_indices = @transform_5, window_bounds = array<i64: 1, 16, 128>}]} {
    %c0_i32 = arith.constant 0 : i32
    %0 = arith.cmpi eq, %arg2, %c0_i32 : i32
    %cst = arith.constant 0.000000e+00 : bf16
    %1 = vector.broadcast %cst : bf16 to vector<8x128xbf16>
    %c0 = arith.constant 0 : index
    %c0_0 = arith.constant 0 : index
    %c0_1 = arith.constant 0 : index
    %2 = vector.load %arg3[%c0, %c0_0, %c0_1] : memref<1x8x128xbf16, #tpu.memory_space<vmem>>, vector<1x8x128xbf16>
    %3 = vector.shape_cast %2 : vector<1x8x128xbf16> to vector<8x128xbf16>
    %4 = arith.select %0, %1, %3 : vector<8x128xbf16>
    %c0_i32_2 = arith.constant 0 : i32
    %5 = arith.cmpi eq, %arg2, %c0_i32_2 : i32
    %cst_3 = arith.constant 0.000000e+00 : bf16
    %6 = vector.broadcast %cst_3 : bf16 to vector<8x128xbf16>
    %c0_4 = arith.constant 0 : index
    %c0_5 = arith.constant 0 : index
    %c0_6 = arith.constant 0 : index
    %7 = vector.load %arg5[%c0_4, %c0_5, %c0_6] : memref<1x8x128xbf16, #tpu.memory_space<vmem>>, vector<1x8x128xbf16>
    %8 = vector.shape_cast %7 : vector<1x8x128xbf16> to vector<8x128xbf16>
    %9 = arith.select %5, %6, %8 : vector<8x128xbf16>
    %c0_7 = arith.constant 0 : index
    %c0_8 = arith.constant 0 : index
    %c0_9 = arith.constant 0 : index
    %10 = vector.load %arg4[%c0_7, %c0_8, %c0_9] : memref<1x16x128xbf16, #tpu.memory_space<vmem>>, vector<1x16x128xbf16>
    %11 = vector.shape_cast %10 : vector<1x16x128xbf16> to vector<16x128xbf16>
    %12 = tpu.concatenate %4, %11, %9 in 0 : vector<8x128xbf16>, vector<16x128xbf16>, vector<8x128xbf16> -> vector<32x128xbf16>
    %13 = vector.extract_strided_slice %12 {offsets = [7, 0], sizes = [16, 128], strides = [1, 1]} : vector<32x128xbf16> to vector<16x128xbf16>
    %14 = vector.extract_strided_slice %12 {offsets = [8, 0], sizes = [16, 128], strides = [1, 1]} : vector<32x128xbf16> to vector<16x128xbf16>
    %15 = vector.extract_strided_slice %12 {offsets = [9, 0], sizes = [16, 128], strides = [1, 1]} : vector<32x128xbf16> to vector<16x128xbf16>
    %16 = tpu.concatenate %13, %14, %15 in 1 : vector<16x128xbf16>, vector<16x128xbf16>, vector<16x128xbf16> -> vector<16x384xbf16>
    %c0_10 = arith.constant 0 : index
    %c0_11 = arith.constant 0 : index
    %17 = vector.load %arg6[%c0_10, %c0_11] : memref<384x128xbf16, #tpu.memory_space<vmem>>, vector<384x128xbf16>
    %cst_12 = arith.constant dense<0.000000e+00> : vector<16x128xf32>
    %18 = tpu.matmul %16, %17, %cst_12 {dimension_numbers = #tpu.dot_dimension_numbers<[1], [0], [0], [1], [0, 0, 1, 1], [], []>} : vector<16x384xbf16>, vector<384x128xbf16>, vector<16x128xf32> -> vector<16x128xf32>
    %c0_13 = arith.constant 0 : index
    %c0_14 = arith.constant 0 : index
    %19 = vector.load %arg7[%c0_13, %c0_14] : memref<1x128xf32, #tpu.memory_space<vmem>>, vector<1x128xf32>
    %20 = vector.broadcast %19 : vector<1x128xf32> to vector<16x128xf32>
    %21 = arith.addf %18, %20 : vector<16x128xf32>
    %cst_15 = arith.constant 0.000000e+00 : f32
    %22 = vector.broadcast %cst_15 : f32 to vector<16x128xf32>
    %23 = arith.maximumf %21, %22 : vector<16x128xf32>
    %24 = arith.truncf %23 : vector<16x128xf32> to vector<16x128xbf16>
    %c0_16 = arith.constant 0 : index
    %c0_17 = arith.constant 0 : index
    %c0_18 = arith.constant 0 : index
    %25 = vector.load %arg8[%c0_16, %c0_17, %c0_18] : memref<1x16x128xbf16, #tpu.memory_space<vmem>>, vector<1x16x128xbf16>
    %26 = vector.shape_cast %25 : vector<1x16x128xbf16> to vector<16x128xbf16>
    %27 = vector.shape_cast %24 : vector<16x128xbf16> to vector<1x16x128xbf16>
    tpu.vector_store %arg8[%c0_16, %c0_17, %c0_18], %27 {strides = array<i32>} : memref<1x16x128xbf16, #tpu.memory_space<vmem>>, vector<1x16x128xbf16>,
    return
  }
  func.func @transform_0(%arg0: i32, %arg1: i32, %arg2: i32) -> (i32, i32, i32) {
    %c2_i32 = arith.constant 2 : i32
    %0 = arith.muli %arg2, %c2_i32 : i32
    %c1_i32 = arith.constant 1 : i32
    %1 = arith.subi %0, %c1_i32 : i32
    %c0_i32 = arith.constant 0 : i32
    %2 = arith.maxsi %1, %c0_i32 : i32
    %c0_i32_0 = arith.constant 0 : i32
    %c0_i32_1 = arith.constant 0 : i32
    return %arg1, %2, %c0_i32_0 : i32, i32, i32
  }
  func.func @transform_1(%arg0: i32, %arg1: i32, %arg2: i32) -> (i32, i32, i32) {
    %c0_i32 = arith.constant 0 : i32
    %c0_i32_0 = arith.constant 0 : i32
    return %arg1, %arg2, %c0_i32 : i32, i32, i32
  }
  func.func @transform_2(%arg0: i32, %arg1: i32, %arg2: i32) -> (i32, i32, i32) {
    %c1_i32 = arith.constant 1 : i32
    %0 = arith.addi %arg2, %c1_i32 : i32
    %c2_i32 = arith.constant 2 : i32
    %1 = arith.muli %0, %c2_i32 : i32
    %c1_i32_0 = arith.constant 1 : i32
    %2 = arith.minsi %1, %c1_i32_0 : i32
    %c0_i32 = arith.constant 0 : i32
    %c0_i32_1 = arith.constant 0 : i32
    return %arg1, %2, %c0_i32 : i32, i32, i32
  }
  func.func @transform_3(%arg0: i32, %arg1: i32, %arg2: i32) -> (i32, i32) {
    %c0_i32 = arith.constant 0 : i32
    %c0_i32_0 = arith.constant 0 : i32
    return %c0_i32, %arg0 : i32, i32
  }
  func.func @transform_4(%arg0: i32, %arg1: i32, %arg2: i32) -> (i32, i32) {
    %c0_i32 = arith.constant 0 : i32
    %c0_i32_0 = arith.constant 0 : i32
    return %c0_i32, %arg0 : i32, i32
  }
  func.func @transform_5(%arg0: i32, %arg1: i32, %arg2: i32) -> (i32, i32, i32) {
    %c0_i32 = arith.constant 0 : i32
    return %arg1, %arg2, %arg0 : i32, i32, i32
  }
}

module attributes {stable_mosaic.version = 11 : i64} {
  func.func @_stage_kernel(%arg0: i32, %arg1: i32, %arg2: i32, %arg3: memref<1x8x128xbf16, #tpu.memory_space<vmem>>, %arg4: memref<1x16x128xbf16, #tpu.memory_space<vmem>>, %arg5: memref<1x8x128xbf16, #tpu.memory_space<vmem>>, %arg6: memref<384x128xbf16, #tpu.memory_space<vmem>>, %arg7: memref<1x128xf32, #tpu.memory_space<vmem>>, %arg8: memref<1x16x128xbf16, #tpu.memory_space<vmem>>, %arg9: memref<128x128xbf16, #tpu.memory_space<vmem>>, %arg10: memref<1x16x128xbf16, #tpu.memory_space<vmem>>) attributes {dimension_semantics = [#tpu.dimension_semantics<parallel>, #tpu.dimension_semantics<parallel>, #tpu.dimension_semantics<parallel>], iteration_bounds = array<i64: 1, 2, 1>, scalar_prefetch = 0 : i64, scratch_operands = 0 : i64, tpu.core_type = #tpu.core_type<tc>, window_params = [{transform_indices = @transform_0, window_bounds = array<i64: 1, 8, 128>}, {transform_indices = @transform_1, window_bounds = array<i64: 1, 16, 128>}, {transform_indices = @transform_2, window_bounds = array<i64: 1, 8, 128>}, {transform_indices = @transform_3, window_bounds = array<i64: 384, 128>}, {transform_indices = @transform_4, window_bounds = array<i64: 1, 128>}, {transform_indices = @transform_5, window_bounds = array<i64: 1, 16, 128>}, {transform_indices = @transform_6, window_bounds = array<i64: 128, 128>}, {transform_indices = @transform_7, window_bounds = array<i64: 1, 16, 128>}]} {
    %c0_i32 = arith.constant 0 : i32
    %0 = arith.cmpi eq, %arg2, %c0_i32 : i32
    %cst = arith.constant 0.000000e+00 : bf16
    %1 = vector.broadcast %cst : bf16 to vector<8x128xbf16>
    %c0 = arith.constant 0 : index
    %c0_0 = arith.constant 0 : index
    %c0_1 = arith.constant 0 : index
    %2 = vector.load %arg3[%c0, %c0_0, %c0_1] : memref<1x8x128xbf16, #tpu.memory_space<vmem>>, vector<1x8x128xbf16>
    %3 = vector.shape_cast %2 : vector<1x8x128xbf16> to vector<8x128xbf16>
    %4 = arith.select %0, %1, %3 : vector<8x128xbf16>
    %c0_i32_2 = arith.constant 0 : i32
    %5 = arith.cmpi eq, %arg2, %c0_i32_2 : i32
    %cst_3 = arith.constant 0.000000e+00 : bf16
    %6 = vector.broadcast %cst_3 : bf16 to vector<8x128xbf16>
    %c0_4 = arith.constant 0 : index
    %c0_5 = arith.constant 0 : index
    %c0_6 = arith.constant 0 : index
    %7 = vector.load %arg5[%c0_4, %c0_5, %c0_6] : memref<1x8x128xbf16, #tpu.memory_space<vmem>>, vector<1x8x128xbf16>
    %8 = vector.shape_cast %7 : vector<1x8x128xbf16> to vector<8x128xbf16>
    %9 = arith.select %5, %6, %8 : vector<8x128xbf16>
    %c0_7 = arith.constant 0 : index
    %c0_8 = arith.constant 0 : index
    %c0_9 = arith.constant 0 : index
    %10 = vector.load %arg4[%c0_7, %c0_8, %c0_9] : memref<1x16x128xbf16, #tpu.memory_space<vmem>>, vector<1x16x128xbf16>
    %11 = vector.shape_cast %10 : vector<1x16x128xbf16> to vector<16x128xbf16>
    %12 = tpu.concatenate %4, %11, %9 in 0 : vector<8x128xbf16>, vector<16x128xbf16>, vector<8x128xbf16> -> vector<32x128xbf16>
    %13 = vector.extract_strided_slice %12 {offsets = [7, 0], sizes = [16, 128], strides = [1, 1]} : vector<32x128xbf16> to vector<16x128xbf16>
    %14 = vector.extract_strided_slice %12 {offsets = [8, 0], sizes = [16, 128], strides = [1, 1]} : vector<32x128xbf16> to vector<16x128xbf16>
    %15 = vector.extract_strided_slice %12 {offsets = [9, 0], sizes = [16, 128], strides = [1, 1]} : vector<32x128xbf16> to vector<16x128xbf16>
    %16 = tpu.concatenate %13, %14, %15 in 1 : vector<16x128xbf16>, vector<16x128xbf16>, vector<16x128xbf16> -> vector<16x384xbf16>
    %c0_10 = arith.constant 0 : index
    %c0_11 = arith.constant 0 : index
    %17 = vector.load %arg6[%c0_10, %c0_11] : memref<384x128xbf16, #tpu.memory_space<vmem>>, vector<384x128xbf16>
    %cst_12 = arith.constant dense<0.000000e+00> : vector<16x128xf32>
    %18 = tpu.matmul %16, %17, %cst_12 {dimension_numbers = #tpu.dot_dimension_numbers<[1], [0], [0], [1], [0, 0, 1, 1], [], []>} : vector<16x384xbf16>, vector<384x128xbf16>, vector<16x128xf32> -> vector<16x128xf32>
    %c0_13 = arith.constant 0 : index
    %c0_14 = arith.constant 0 : index
    %c0_15 = arith.constant 0 : index
    %19 = vector.load %arg8[%c0_13, %c0_14, %c0_15] : memref<1x16x128xbf16, #tpu.memory_space<vmem>>, vector<1x16x128xbf16>
    %20 = vector.shape_cast %19 : vector<1x16x128xbf16> to vector<16x128xbf16>
    %c0_16 = arith.constant 0 : index
    %c0_17 = arith.constant 0 : index
    %21 = vector.load %arg9[%c0_16, %c0_17] : memref<128x128xbf16, #tpu.memory_space<vmem>>, vector<128x128xbf16>
    %cst_18 = arith.constant dense<0.000000e+00> : vector<16x128xf32>
    %22 = tpu.matmul %20, %21, %cst_18 {dimension_numbers = #tpu.dot_dimension_numbers<[1], [0], [0], [1], [0, 0, 1, 1], [], []>} : vector<16x128xbf16>, vector<128x128xbf16>, vector<16x128xf32> -> vector<16x128xf32>
    %23 = arith.addf %18, %22 : vector<16x128xf32>
    %c0_19 = arith.constant 0 : index
    %c0_20 = arith.constant 0 : index
    %24 = vector.load %arg7[%c0_19, %c0_20] : memref<1x128xf32, #tpu.memory_space<vmem>>, vector<1x128xf32>
    %25 = vector.broadcast %24 : vector<1x128xf32> to vector<16x128xf32>
    %26 = arith.addf %23, %25 : vector<16x128xf32>
    %cst_21 = arith.constant 0.000000e+00 : f32
    %27 = vector.broadcast %cst_21 : f32 to vector<16x128xf32>
    %28 = arith.maximumf %26, %27 : vector<16x128xf32>
    %29 = arith.truncf %28 : vector<16x128xf32> to vector<16x128xbf16>
    %c0_22 = arith.constant 0 : index
    %c0_23 = arith.constant 0 : index
    %c0_24 = arith.constant 0 : index
    %30 = vector.load %arg10[%c0_22, %c0_23, %c0_24] : memref<1x16x128xbf16, #tpu.memory_space<vmem>>, vector<1x16x128xbf16>
    %31 = vector.shape_cast %30 : vector<1x16x128xbf16> to vector<16x128xbf16>
    %32 = vector.shape_cast %29 : vector<16x128xbf16> to vector<1x16x128xbf16>
    tpu.vector_store %arg10[%c0_22, %c0_23, %c0_24], %32 {strides = array<i32>} : memref<1x16x128xbf16, #tpu.memory_space<vmem>>, vector<1x16x128xbf16>,
    return
  }
  func.func @transform_0(%arg0: i32, %arg1: i32, %arg2: i32) -> (i32, i32, i32) {
    %c2_i32 = arith.constant 2 : i32
    %0 = arith.muli %arg2, %c2_i32 : i32
    %c1_i32 = arith.constant 1 : i32
    %1 = arith.subi %0, %c1_i32 : i32
    %c0_i32 = arith.constant 0 : i32
    %2 = arith.maxsi %1, %c0_i32 : i32
    %c0_i32_0 = arith.constant 0 : i32
    %c0_i32_1 = arith.constant 0 : i32
    return %arg1, %2, %c0_i32_0 : i32, i32, i32
  }
  func.func @transform_1(%arg0: i32, %arg1: i32, %arg2: i32) -> (i32, i32, i32) {
    %c0_i32 = arith.constant 0 : i32
    %c0_i32_0 = arith.constant 0 : i32
    return %arg1, %arg2, %c0_i32 : i32, i32, i32
  }
  func.func @transform_2(%arg0: i32, %arg1: i32, %arg2: i32) -> (i32, i32, i32) {
    %c1_i32 = arith.constant 1 : i32
    %0 = arith.addi %arg2, %c1_i32 : i32
    %c2_i32 = arith.constant 2 : i32
    %1 = arith.muli %0, %c2_i32 : i32
    %c1_i32_0 = arith.constant 1 : i32
    %2 = arith.minsi %1, %c1_i32_0 : i32
    %c0_i32 = arith.constant 0 : i32
    %c0_i32_1 = arith.constant 0 : i32
    return %arg1, %2, %c0_i32 : i32, i32, i32
  }
  func.func @transform_3(%arg0: i32, %arg1: i32, %arg2: i32) -> (i32, i32) {
    %c0_i32 = arith.constant 0 : i32
    %c0_i32_0 = arith.constant 0 : i32
    return %c0_i32, %arg0 : i32, i32
  }
  func.func @transform_4(%arg0: i32, %arg1: i32, %arg2: i32) -> (i32, i32) {
    %c0_i32 = arith.constant 0 : i32
    %c0_i32_0 = arith.constant 0 : i32
    return %c0_i32, %arg0 : i32, i32
  }
  func.func @transform_5(%arg0: i32, %arg1: i32, %arg2: i32) -> (i32, i32, i32) {
    %c0_i32 = arith.constant 0 : i32
    %c0_i32_0 = arith.constant 0 : i32
    return %arg1, %arg2, %c0_i32 : i32, i32, i32
  }
  func.func @transform_6(%arg0: i32, %arg1: i32, %arg2: i32) -> (i32, i32) {
    %c0_i32 = arith.constant 0 : i32
    %c0_i32_0 = arith.constant 0 : i32
    return %c0_i32, %arg0 : i32, i32
  }
  func.func @transform_7(%arg0: i32, %arg1: i32, %arg2: i32) -> (i32, i32, i32) {
    %c0_i32 = arith.constant 0 : i32
    return %arg1, %arg2, %arg0 : i32, i32, i32
  }
}

</mosaic_0001>

<llo_original>
// kernel: jasper_block.5
$region0: #{jasper_block.5}
  #allocation0 [shape = 'u32[]', space=smem, size = 0x4, offset = 0x4, fixed_abs, tag = 'smem constant byte address 0x4 - core index']
  #allocation1 [shape = 'u32[144,128]{1,0:T(1,128)}', space=vmem, size = 0x12000, scoped, tag = 'internal scratch']
  %s0 = inlined_call_operand.vmem [shape: bf16[2,16,128], index: 0, kind: input, shape index: {}, may-alias: {0,1,2}]
  %s1 = inlined_call_operand.vmem [shape: bf16[2,16,128], index: 1, kind: input, shape index: {}, may-alias: {0,1,2}]
  %s2 = inlined_call_operand.vmem [shape: bf16[2,16,128], index: 2, kind: input, shape index: {}, may-alias: {0,1,2}]
  %s3 = inlined_call_operand.vmem [shape: bf16[384,128], index: 3, kind: input, shape index: {}]
  %s4 = inlined_call_operand.vmem [shape: f32[1,128], index: 4, kind: input, shape index: {}]
  %s5 = inlined_call_operand.vmem [shape: bf16[2,16,128], index: 5, kind: input, shape index: {}]
  %s6 = inlined_call_operand.vmem [shape: bf16[128,128], index: 6, kind: input, shape index: {}]
  %s7 = inlined_call_operand.vmem [shape: bf16[2,16,128], index: 7, kind: output, shape index: {}]
  %s8 = sld [smem:[#allocation0]]
  $region61: #{jasper_block.5} parent=0
    _
  %s10 = ssub.s32 1, %s8
  %s11 = scalar_select 0, %s10, %s8
  loop: start=0, step=1, limit=4
  $region2: #{jasper_block.5} parent=0 // loop_pre_header
    _
  $region3: #{jasper_block.5} parent=0 // loop_header
    %s13 = sphi 0, %s17
    %p14 = scmp.ge.s32.totalorder %s13, 4
    %s20 = sphi 0, %s39
    %s21 = sphi 0, %s35
    %s22 = sphi 0, %s31
    %s23 = sphi 0, %s20
    %s24 = sphi 0, %s21
    %s25 = sphi 0, %s22
    %s26 = sphi 0, %s23
    %s27 = sphi 0, %s24
    %s28 = sphi 0, %s25
    %s52 = sphi 0, %s54
    %s55 = sphi 0, %s52
    %s56 = sphi 0, %s55
    %s72 = sphi 0, %s56
    %s80 = sphi 0, %s82
    %s83 = sphi 0, %s80
    %s84 = sphi 0, %s83
    %s100 = sphi 0, %s84
    %s116 = sphi 0, %s118
    %s119 = sphi 0, %s116
    %s120 = sphi 0, %s119
    %s136 = sphi 0, %s120
    %s142 = sphi 0, %s144
    %s145 = sphi 0, %s142
    %s146 = sphi 0, %s145
    %s162 = sphi 0, %s146
    %s168 = sphi 0, %s170
    %s171 = sphi 0, %s168
    %s172 = sphi 0, %s171
    %s188 = sphi 0, %s172
    %s196 = sphi 0, %s198
    %s199 = sphi 0, %s196
    %s200 = sphi 0, %s199
    %s216 = sphi 0, %s200
    %s222 = sphi 0, %s224
    %s225 = sphi 0, %s222
    %s226 = sphi 0, %s225
    %s242 = sphi 0, %s226
    %s252 = sphi 0, %s254
    %s255 = sphi 0, %s252
    %s256 = sphi 0, %s255
    %s272 = sphi 0, %s256
  $region4: #{jasper_block.5} parent=0 // loop_header_branch
    %16 = sbr.rel (%p14) target = $region8
  $region5: #{jasper_block.5} parent=0 // loop_body
    %s18 = ssub.s32 %s13, 1
    %s19 = ssub.s32 %s13, 2
    %s29 = sadd.s32 1, %s22
    %p30 = scmp.ge.s32.totalorder %s29, 1
    %s31 = scalar_select %p30, 0, %s29
    %s32 = sadd.s32 1, %s21
    %s33 = scalar_select %p30, %s32, %s21
    %p34 = scmp.ge.s32.totalorder %s33, 2
    %s35 = scalar_select %p34, 0, %s33
    %s36 = sadd.s32 1, %s20
    %s37 = scalar_select %p34, %s36, %s20
    %p38 = scmp.ge.s32.totalorder %s37, 1
    %s39 = scalar_select %p38, 0, %s37
    %s40 = smul.u32 %s22, 2
    %s41 = ssub.s32 %s40, 1
    %p42 = scmp.gt.s32.totalorder %s41, 0
    %s43 = scalar_select %p42, %s41, 0
    %s44 = smul.u32 %s31, 2
    %s45 = ssub.s32 %s44, 1
    %p46 = scmp.gt.s32.totalorder %s45, 0
    %s47 = scalar_select %p46, %s45, 0
    %s48 = ssub.s32 %s21, %s35
    %s49 = ssub.s32 %s43, %s47
    %s50 = sor.u32 %s48, %s49
    %p51 = scmp.eq.s32.totalorder %s50, 0
    %s53 = sadd.s32 %s52, 1
    %s54 = scalar_select %p51, %s52, %s53
    %p57 = pneg %p51
    %p58 = scmp.eq.s32.totalorder %s13, 1
    %p59 = por %p57, %p58
    %p60 = scmp.ne.s32.totalorder %s52, %s55
    %p61 = scmp.eq.s32.totalorder %s13, 0
    %p62 = por %p60, %p61
    %p63 = scmp.ne.s32.totalorder %s52, %s55
    %p64 = scmp.eq.s32.totalorder %s18, 1
    %p65 = por %p63, %p64
    %p66 = scmp.ne.s32.totalorder %s55, %s56
    %p67 = scmp.eq.s32.totalorder %s18, 0
    %p68 = por %p66, %p67
    %p69 = scmp.ne.s32.totalorder %s55, %s56
    %p70 = scmp.eq.s32.totalorder %s19, 1
    %p71 = por %p69, %p70
    %p73 = scmp.ne.s32.totalorder %s56, %s72
    %p74 = scmp.eq.s32.totalorder %s19, 0
    %p75 = por %p73, %p74
    %s76 = ssub.s32 %s21, %s35
    %s77 = ssub.s32 %s22, %s31
    %s78 = sor.u32 %s76, %s77
    %p79 = scmp.eq.s32.totalorder %s78, 0
    %s81 = sadd.s32 %s80, 1
    %s82 = scalar_select %p79, %s80, %s81
    %p85 = pneg %p79
    %p86 = scmp.eq.s32.totalorder %s13, 1
    %p87 = por %p85, %p86
    %p88 = scmp.ne.s32.totalorder %s80, %s83
    %p89 = scmp.eq.s32.totalorder %s13, 0
    %p90 = por %p88, %p89
    %p91 = scmp.ne.s32.totalorder %s80, %s83
    %p92 = scmp.eq.s32.totalorder %s18, 1
    %p93 = por %p91, %p92
    %p94 = scmp.ne.s32.totalorder %s83, %s84
    %p95 = scmp.eq.s32.totalorder %s18, 0
    %p96 = por %p94, %p95
    %p97 = scmp.ne.s32.totalorder %s83, %s84
    %p98 = scmp.eq.s32.totalorder %s19, 1
    %p99 = por %p97, %p98
    %p101 = scmp.ne.s32.totalorder %s84, %s100
    %p102 = scmp.eq.s32.totalorder %s19, 0
    %p103 = por %p101, %p102
    %s104 = sadd.s32 %s22, 1
    %s105 = smul.u32 %s104, 2
    %p106 = scmp.lt.s32.totalorder %s105, 1
    %s107 = scalar_select %p106, %s105, 1
    %s108 = sadd.s32 %s31, 1
    %s109 = smul.u32 %s108, 2
    %p110 = scmp.lt.s32.totalorder %s109, 1
    %s111 = scalar_select %p110, %s109, 1
    %s112 = ssub.s32 %s21, %s35
    %s113 = ssub.s32 %s107, %s111
    %s114 = sor.u32 %s112, %s113
    %p115 = scmp.eq.s32.totalorder %s114, 0
    %s117 = sadd.s32 %s116, 1
    %s118 = scalar_select %p115, %s116, %s117
    %p121 = pneg %p115
    %p122 = scmp.eq.s32.totalorder %s13, 1
    %p123 = por %p121, %p122
    %p124 = scmp.ne.s32.totalorder %s116, %s119
    %p125 = scmp.eq.s32.totalorder %s13, 0
    %p126 = por %p124, %p125
    %p127 = scmp.ne.s32.totalorder %s116, %s119
    %p128 = scmp.eq.s32.totalorder %s18, 1
    %p129 = por %p127, %p128
    %p130 = scmp.ne.s32.totalorder %s119, %s120
    %p131 = scmp.eq.s32.totalorder %s18, 0
    %p132 = por %p130, %p131
    %p133 = scmp.ne.s32.totalorder %s119, %s120
    %p134 = scmp.eq.s32.totalorder %s19, 1
    %p135 = por %p133, %p134
    %p137 = scmp.ne.s32.totalorder %s120, %s136
    %p138 = scmp.eq.s32.totalorder %s19, 0
    %p139 = por %p137, %p138
    %s140 = ssub.s32 %s20, %s39
    %p141 = scmp.eq.s32.totalorder %s140, 0
    %s143 = sadd.s32 %s142, 1
    %s144 = scalar_select %p141, %s142, %s143
    %p147 = pneg %p141
    %p148 = scmp.eq.s32.totalorder %s13, 1
    %p149 = por %p147, %p148
    %p150 = scmp.ne.s32.totalorder %s142, %s145
    %p151 = scmp.eq.s32.totalorder %s13, 0
    %p152 = por %p150, %p151
    %p153 = scmp.ne.s32.totalorder %s142, %s145
    %p154 = scmp.eq.s32.totalorder %s18, 1
    %p155 = por %p153, %p154
    %p156 = scmp.ne.s32.totalorder %s145, %s146
    %p157 = scmp.eq.s32.totalorder %s18, 0
    %p158 = por %p156, %p157
    %p159 = scmp.ne.s32.totalorder %s145, %s146
    %p160 = scmp.eq.s32.totalorder %s19, 1
    %p161 = por %p159, %p160
    %p163 = scmp.ne.s32.totalorder %s146, %s162
    %p164 = scmp.eq.s32.totalorder %s19, 0
    %p165 = por %p163, %p164
    %s166 = ssub.s32 %s20, %s39
    %p167 = scmp.eq.s32.totalorder %s166, 0
    %s169 = sadd.s32 %s168, 1
    %s170 = scalar_select %p167, %s168, %s169
    %p173 = pneg %p167
    %p174 = scmp.eq.s32.totalorder %s13, 1
    %p175 = por %p173, %p174
    %p176 = scmp.ne.s32.totalorder %s168, %s171
    %p177 = scmp.eq.s32.totalorder %s13, 0
    %p178 = por %p176, %p177
    %p179 = scmp.ne.s32.totalorder %s168, %s171
    %p180 = scmp.eq.s32.totalorder %s18, 1
    %p181 = por %p179, %p180
    %p182 = scmp.ne.s32.totalorder %s171, %s172
    %p183 = scmp.eq.s32.totalorder %s18, 0
    %p184 = por %p182, %p183
    %p185 = scmp.ne.s32.totalorder %s171, %s172
    %p186 = scmp.eq.s32.totalorder %s19, 1
    %p187 = por %p185, %p186
    %p189 = scmp.ne.s32.totalorder %s172, %s188
    %p190 = scmp.eq.s32.totalorder %s19, 0
    %p191 = por %p189, %p190
    %s192 = ssub.s32 %s21, %s35
    %s193 = ssub.s32 %s22, %s31
    %s194 = sor.u32 %s192, %s193
    %p195 = scmp.eq.s32.totalorder %s194, 0
    %s197 = sadd.s32 %s196, 1
    %s198 = scalar_select %p195, %s196, %s197
    %p201 = pneg %p195
    %p202 = scmp.eq.s32.totalorder %s13, 1
    %p203 = por %p201, %p202
    %p204 = scmp.ne.s32.totalorder %s196, %s199
    %p205 = scmp.eq.s32.totalorder %s13, 0
    %p206 = por %p204, %p205
    %p207 = scmp.ne.s32.totalorder %s196, %s199
    %p208 = scmp.eq.s32.totalorder %s18, 1
    %p209 = por %p207, %p208
    %p210 = scmp.ne.s32.totalorder %s199, %s200
    %p211 = scmp.eq.s32.totalorder %s18, 0
    %p212 = por %p210, %p211
    %p213 = scmp.ne.s32.totalorder %s199, %s200
    %p214 = scmp.eq.s32.totalorder %s19, 1
    %p215 = por %p213, %p214
    %p217 = scmp.ne.s32.totalorder %s200, %s216
    %p218 = scmp.eq.s32.totalorder %s19, 0
    %p219 = por %p217, %p218
    %s220 = ssub.s32 %s20, %s39
    %p221 = scmp.eq.s32.totalorder %s220, 0
    %s223 = sadd.s32 %s222, 1
    %s224 = scalar_select %p221, %s222, %s223
    %p227 = pneg %p221
    %p228 = scmp.eq.s32.totalorder %s13, 1
    %p229 = por %p227, %p228
    %p230 = scmp.ne.s32.totalorder %s222, %s225
    %p231 = scmp.eq.s32.totalorder %s13, 0
    %p232 = por %p230, %p231
    %p233 = scmp.ne.s32.totalorder %s222, %s225
    %p234 = scmp.eq.s32.totalorder %s18, 1
    %p235 = por %p233, %p234
    %p236 = scmp.ne.s32.totalorder %s225, %s226
    %p237 = scmp.eq.s32.totalorder %s18, 0
    %p238 = por %p236, %p237
    %p239 = scmp.ne.s32.totalorder %s225, %s226
    %p240 = scmp.eq.s32.totalorder %s19, 1
    %p241 = por %p239, %p240
    %p243 = scmp.ne.s32.totalorder %s226, %s242
    %p244 = scmp.eq.s32.totalorder %s19, 0
    %p245 = por %p243, %p244
    %s246 = ssub.s32 %s21, %s35
    %s247 = ssub.s32 %s22, %s31
    %s248 = sor.u32 %s246, %s247
    %s249 = ssub.s32 %s20, %s39
    %s250 = sor.u32 %s248, %s249
    %p251 = scmp.eq.s32.totalorder %s250, 0
    %s253 = sadd.s32 %s252, 1
    %s254 = scalar_select %p251, %s252, %s253
    %p257 = pneg %p251
    %p258 = scmp.eq.s32.totalorder %s13, 1
    %p259 = por %p257, %p258
    %p260 = scmp.ne.s32.totalorder %s252, %s255
    %p261 = scmp.eq.s32.totalorder %s13, 0
    %p262 = por %p260, %p261
    %p263 = scmp.ne.s32.totalorder %s252, %s255
    %p264 = scmp.eq.s32.totalorder %s18, 1
    %p265 = por %p263, %p264
    %p266 = scmp.ne.s32.totalorder %s255, %s256
    %p267 = scmp.eq.s32.totalorder %s18, 0
    %p268 = por %p266, %p267
    %p269 = scmp.ne.s32.totalorder %s255, %s256
    %p270 = scmp.eq.s32.totalorder %s19, 1
    %p271 = por %p269, %p270
    %p273 = scmp.ne.s32.totalorder %s256, %s272
    %p274 = scmp.eq.s32.totalorder %s19, 0
    %p275 = por %p273, %p274
    %p276 = scmp.le.s32.totalorder 1, %s13
    %p277 = scmp.lt.s32.totalorder %s13, 3
    %p278 = pnand %p276, %p277
    %p279 = pneg %p278
    // Predicated region
    $region9: #{jasper_block.5} parent=5 // pred_check
      _
    $region10: #{jasper_block.5} parent=5 // pred_check_branch
      %281 = sbr.rel (%p278) target = $region12
    $region11: #{jasper_block.5} parent=5 // pred_region
      %s282 = ssub.s32 %s13, 1
      // Predicated region
      $region13: #{jasper_block.5} parent=11 // pred_check
        %p283 = pneg %p158
      $region14: #{jasper_block.5} parent=11 // pred_check_branch
        %285 = sbr.rel (%p283) target = $region16
      $region15: #{jasper_block.5} parent=11 // pred_region
        %p286 = scmp.lt.s32.totalorder %s23, 0
        %s287 = scalar_select %p286, %s23, 0
        %s288 = smul.addr %s287, 4
        %s289 = scalar_lea.vmem %s3, %s288
      $region16: #{jasper_block.5} parent=11 // pred_fallthru
        _
      // Predicated region
      $region17: #{jasper_block.5} parent=11 // pred_check
        %p290 = pneg %p184
      $region18: #{jasper_block.5} parent=11 // pred_check_branch
        %292 = sbr.rel (%p290) target = $region20
      $region19: #{jasper_block.5} parent=11 // pred_region
        %p293 = scmp.lt.s32.totalorder %s23, 0
        %s294 = scalar_select %p293, %s23, 0
        %s295 = scalar_lea.vmem %s4, %s294
      $region20: #{jasper_block.5} parent=11 // pred_fallthru
        _
      // Predicated region
      $region21: #{jasper_block.5} parent=11 // pred_check
        %p296 = pneg %p238
      $region22: #{jasper_block.5} parent=11 // pred_check_branch
        %298 = sbr.rel (%p296) target = $region24
      $region23: #{jasper_block.5} parent=11 // pred_region
        %p299 = scmp.lt.s32.totalorder %s23, 0
        %s300 = scalar_select %p299, %s23, 0
        %s301 = smul.addr %s300, 4
        %s302 = scalar_lea.vmem %s6, %s301
      $region24: #{jasper_block.5} parent=11 // pred_fallthru
        _
    $region12: #{jasper_block.5} parent=5 // pred_fallthru
      _
    %p303 = scmp.lt.s32.totalorder %s13, 2
    // Predicated region
    $region25: #{jasper_block.5} parent=5 // pred_check
      %p304 = pneg %p303
    $region26: #{jasper_block.5} parent=5 // pred_check_branch
      %306 = sbr.rel (%p304) target = $region28
    $region27: #{jasper_block.5} parent=5 // pred_region
      // Predicated region
      $region29: #{jasper_block.5} parent=27 // pred_check
        %p307 = pneg %p62
      $region30: #{jasper_block.5} parent=27 // pred_check_branch
        %309 = sbr.rel (%p307) target = $region32
      $region31: #{jasper_block.5} parent=27 // pred_region
        %s310 = smul.u32 %s22, 2
        %s311 = ssub.s32 %s310, 1
        %p312 = scmp.gt.s32.totalorder %s311, 0
        %s313 = scalar_select %p312, %s311, 0
        %p314 = scmp.lt.s32.totalorder %s21, 1
        %s315 = scalar_select %p314, %s21, 1
        %p316 = scmp.lt.s32.totalorder %s313, 1
        %s317 = scalar_select %p316, %s313, 1
        %s318 = smul.addr %s315, 2
        %s319 = sadd.s32 %s317, %s318
        %s320 = smul.addr %s319, 4
        %s321 = scalar_lea.vmem %s0, %s320
        %s322 = smul.u32 %s22, 2
        %s323 = ssub.s32 %s322, 1
        %p324 = scmp.gt.s32.totalorder %s323, 0
        %s325 = scalar_select %p324, %s323, 0
      $region32: #{jasper_block.5} parent=27 // pred_fallthru
        _
      // Predicated region
      $region33: #{jasper_block.5} parent=27 // pred_check
        %p326 = pneg %p90
      $region34: #{jasper_block.5} parent=27 // pred_check_branch
        %328 = sbr.rel (%p326) target = $region36
      $region35: #{jasper_block.5} parent=27 // pred_region
        %s329 = smul.u32 2, %s22
        %p330 = scmp.lt.s32.totalorder %s21, 1
        %s331 = scalar_select %p330, %s21, 1
        %p332 = scmp.lt.s32.totalorder %s329, 1
        %s333 = scalar_select %p332, %s329, 1
        %s334 = smul.addr %s331, 2
        %s335 = sadd.s32 %s333, %s334
        %s336 = smul.addr %s335, 4
        %s337 = scalar_lea.vmem %s1, %s336
        %s338 = smul.u32 2, %s22
      $region36: #{jasper_block.5} parent=27 // pred_fallthru
        _
      // Predicated region
      $region37: #{jasper_block.5} parent=27 // pred_check
        %p339 = pneg %p126
      $region38: #{jasper_block.5} parent=27 // pred_check_branch
        %341 = sbr.rel (%p339) target = $region40
      $region39: #{jasper_block.5} parent=27 // pred_region
        %s342 = sadd.s32 %s22, 1
        %s343 = smul.u32 %s342, 2
        %p344 = scmp.lt.s32.totalorder %s343, 1
        %s345 = scalar_select %p344, %s343, 1
        %p346 = scmp.lt.s32.totalorder %s21, 1
        %s347 = scalar_select %p346, %s21, 1
        %p348 = scmp.lt.s32.totalorder %s345, 1
        %s349 = scalar_select %p348, %s345, 1
        %s350 = smul.addr %s347, 2
        %s351 = sadd.s32 %s349, %s350
        %s352 = smul.addr %s351, 4
        %s353 = scalar_lea.vmem %s2, %s352
        %s354 = sadd.s32 %s22, 1
        %s355 = smul.u32 %s354, 2
        %p356 = scmp.lt.s32.totalorder %s355, 1
        %s357 = scalar_select %p356, %s355, 1
      $region40: #{jasper_block.5} parent=27 // pred_fallthru
        _
      // Predicated region
      $region41: #{jasper_block.5} parent=27 // pred_check
        %p358 = pneg %p206
      $region42: #{jasper_block.5} parent=27 // pred_check_branch
        %360 = sbr.rel (%p358) target = $region44
      $region43: #{jasper_block.5} parent=27 // pred_region
        %s361 = smul.u32 2, %s22
        %p362 = scmp.lt.s32.totalorder %s21, 1
        %s363 = scalar_select %p362, %s21, 1
        %p364 = scmp.lt.s32.totalorder %s361, 1
        %s365 = scalar_select %p364, %s361, 1
        %s366 = smul.addr %s363, 2
        %s367 = sadd.s32 %s365, %s366
        %s368 = smul.addr %s367, 4
        %s369 = scalar_lea.vmem %s5, %s368
        %s370 = smul.u32 2, %s22
      $region44: #{jasper_block.5} parent=27 // pred_fallthru
        _
    $region28: #{jasper_block.5} parent=5 // pred_fallthru
      _
    %p371 = scmp.le.s32.totalorder 1, %s13
    %p372 = scmp.lt.s32.totalorder %s13, 3
    %p373 = pnand %p371, %p372
    %p374 = pneg %p373
    // Predicated region
    $region45: #{jasper_block.5} parent=5 // pred_check
      _
    $region46: #{jasper_block.5} parent=5 // pred_check_branch
      %376 = sbr.rel (%p373) target = $region48
    $region47: #{jasper_block.5} parent=5 // pred_region
      %s377 = ssub.s32 %s13, 1
      %s378 = smul.u32 %s25, 2
      %s379 = ssub.s32 %s378, 1
      %p380 = scmp.gt.s32.totalorder %s379, 0
      %s381 = scalar_select %p380, %s379, 0
      %p382 = scmp.lt.s32.totalorder %s24, 1
      %s383 = scalar_select %p382, %s24, 1
      %p384 = scmp.lt.s32.totalorder %s381, 1
      %s385 = scalar_select %p384, %s381, 1
      %s386 = smul.addr %s383, 2
      %s387 = sadd.s32 %s385, %s386
      %s388 = smul.addr %s387, 4
      %s389 = scalar_lea.vmem %s0, %s388
      %p390 = pneg %p68
      %p391 = pneg %p65
      %s392 = smul.u32 2, %s25
      %p393 = scmp.lt.s32.totalorder %s24, 1
      %s394 = scalar_select %p393, %s24, 1
      %p395 = scmp.lt.s32.totalorder %s392, 1
      %s396 = scalar_select %p395, %s392, 1
      %s397 = smul.addr %s394, 2
      %s398 = sadd.s32 %s396, %s397
      %s399 = smul.addr %s398, 4
      %s400 = scalar_lea.vmem %s1, %s399
      %p401 = pneg %p96
      %p402 = pneg %p93
      %s403 = sadd.s32 %s25, 1
      %s404 = smul.u32 %s403, 2
      %p405 = scmp.lt.s32.totalorder %s404, 1
      %s406 = scalar_select %p405, %s404, 1
      %p407 = scmp.lt.s32.totalorder %s24, 1
      %s408 = scalar_select %p407, %s24, 1
      %p409 = scmp.lt.s32.totalorder %s406, 1
      %s410 = scalar_select %p409, %s406, 1
      %s411 = smul.addr %s408, 2
      %s412 = sadd.s32 %s410, %s411
      %s413 = smul.addr %s412, 4
      %s414 = scalar_lea.vmem %s2, %s413
      %p415 = pneg %p132
      %p416 = pneg %p129
      %p417 = scmp.lt.s32.totalorder %s23, 0
      %s418 = scalar_select %p417, %s23, 0
      %s419 = smul.addr %s418, 4
      %s420 = scalar_lea.vmem %s3, %s419
      %p421 = pneg %p158
      %p422 = pneg %p155
      %p423 = scmp.lt.s32.totalorder %s23, 0
      %s424 = scalar_select %p423, %s23, 0
      %s425 = scalar_lea.vmem %s4, %s424
      %p426 = pneg %p184
      %p427 = pneg %p181
      %s428 = smul.u32 2, %s25
      %p429 = scmp.lt.s32.totalorder %s24, 1
      %s430 = scalar_select %p429, %s24, 1
      %p431 = scmp.lt.s32.totalorder %s428, 1
      %s432 = scalar_select %p431, %s428, 1
      %s433 = smul.addr %s430, 2
      %s434 = sadd.s32 %s432, %s433
      %s435 = smul.addr %s434, 4
      %s436 = scalar_lea.vmem %s5, %s435
      %p437 = pneg %p212
      %p438 = pneg %p209
      %p439 = scmp.lt.s32.totalorder %s23, 0
      %s440 = scalar_select %p439, %s23, 0
      %s441 = smul.addr %s440, 4
      %s442 = scalar_lea.vmem %s6, %s441
      %p443 = pneg %p238
      %p444 = pneg %p235
      %p445 = pneg %p268
      %p446 = pneg %p265
      %s447 = smul.u32 2, %s25
      %p448 = scmp.lt.s32.totalorder %s24, 1
      %s449 = scalar_select %p448, %s24, 1
      %p450 = scmp.lt.s32.totalorder %s447, 1
      %s451 = scalar_select %p450, %s447, 1
      %p452 = scmp.lt.s32.totalorder %s23, 0
      %s453 = scalar_select %p452, %s23, 0
      %s454 = sadd.s32 %s453, %s451
      %s455 = smul.addr %s449, 2
      %s456 = sadd.s32 %s454, %s455
      %s457 = smul.addr %s456, 4
      %s458 = scalar_lea.vmem %s7, %s457
      %s459 = smul.u32 %s25, 2
      %s460 = ssub.s32 %s459, 1
      %p461 = scmp.gt.s32.totalorder %s460, 0
      %s462 = scalar_select %p461, %s460, 0
      %p463 = scmp.lt.s32.totalorder %s24, 1
      %s464 = scalar_select %p463, %s24, 1
      %p465 = scmp.lt.s32.totalorder %s462, 1
      %s466 = scalar_select %p465, %s462, 1
      %s467 = smul.addr %s464, 2
      %s468 = sadd.s32 %s466, %s467
      %s469 = smul.addr %s468, 4
      %s470 = scalar_lea.vmem %s0, %s469
      %s471 = smul.u32 %s25, 2
      %s472 = ssub.s32 %s471, 1
      %p473 = scmp.gt.s32.totalorder %s472, 0
      %s474 = scalar_select %p473, %s472, 0
      %s475 = smul.u32 2, %s25
      %p476 = scmp.lt.s32.totalorder %s24, 1
      %s477 = scalar_select %p476, %s24, 1
      %p478 = scmp.lt.s32.totalorder %s475, 1
      %s479 = scalar_select %p478, %s475, 1
      %s480 = smul.addr %s477, 2
      %s481 = sadd.s32 %s479, %s480
      %s482 = smul.addr %s481, 4
      %s483 = scalar_lea.vmem %s1, %s482
      %s484 = smul.u32 2, %s25
      %s485 = sadd.s32 %s25, 1
      %s486 = smul.u32 %s485, 2
      %p487 = scmp.lt.s32.totalorder %s486, 1
      %s488 = scalar_select %p487, %s486, 1
      %p489 = scmp.lt.s32.totalorder %s24, 1
      %s490 = scalar_select %p489, %s24, 1
      %p491 = scmp.lt.s32.totalorder %s488, 1
      %s492 = scalar_select %p491, %s488, 1
      %s493 = smul.addr %s490, 2
      %s494 = sadd.s32 %s492, %s493
      %s495 = smul.addr %s494, 4
      %s496 = scalar_lea.vmem %s2, %s495
      %s497 = sadd.s32 %s25, 1
      %s498 = smul.u32 %s497, 2
      %p499 = scmp.lt.s32.totalorder %s498, 1
      %s500 = scalar_select %p499, %s498, 1
      %p501 = scmp.lt.s32.totalorder %s23, 0
      %s502 = scalar_select %p501, %s23, 0
      %s503 = smul.addr %s502, 4
      %s504 = scalar_lea.vmem %s3, %s503
      %p505 = scmp.lt.s32.totalorder %s23, 0
      %s506 = scalar_select %p505, %s23, 0
      %s507 = scalar_lea.vmem %s4, %s506
      %s508 = smul.u32 2, %s25
      %p509 = scmp.lt.s32.totalorder %s24, 1
      %s510 = scalar_select %p509, %s24, 1
      %p511 = scmp.lt.s32.totalorder %s508, 1
      %s512 = scalar_select %p511, %s508, 1
      %s513 = smul.addr %s510, 2
      %s514 = sadd.s32 %s512, %s513
      %s515 = smul.addr %s514, 4
      %s516 = scalar_lea.vmem %s5, %s515
      %s517 = smul.u32 2, %s25
      %p518 = scmp.lt.s32.totalorder %s23, 0
      %s519 = scalar_select %p518, %s23, 0
      %s520 = smul.addr %s519, 4
      %s521 = scalar_lea.vmem %s6, %s520
      %s522 = smul.u32 2, %s25
      %p523 = scmp.lt.s32.totalorder %s24, 1
      %s524 = scalar_select %p523, %s24, 1
      %p525 = scmp.lt.s32.totalorder %s522, 1
      %s526 = scalar_select %p525, %s522, 1
      %p527 = scmp.lt.s32.totalorder %s23, 0
      %s528 = scalar_select %p527, %s23, 0
      %s529 = sadd.s32 %s528, %s526
      %s530 = smul.addr %s524, 2
      %s531 = sadd.s32 %s529, %s530
      %s532 = smul.addr %s531, 4
      %s533 = scalar_lea.vmem %s7, %s532
      %s534 = smul.u32 2, %s25
      %p536 = scmp.eq.s32.totalorder %s25, 0
      %v537 = vld [vmem:[%s470] sm:$0xf]
      %s538 = scalar_select %p536, 1, 0
      %v539 = vstv %s538
      %vm540 = vcmp.eq.s32.totalorder %v539, 1
      %v541 = vsel %vm540, 0, %v537
      %v542 = vld [vmem:[%s496] sm:$0xf]
      %v543 = vsel %vm540, 0, %v542
      %v544 = vld [vmem:[%s483] sm:$0xf]
      %v545 = vld [vmem:[%s483 + $0x4] sm:$0xf]
      %v548 = vunpack.c.l.b16 %v544
      %v549 = vunpack.c.l.b16 %v545
      %v550 = vpack.c.b16 %v548, %v548
      %v551 = vpack.c.b16 %v549, %v549
      %v553 = vunpack.c.l.b16 %v543
      %v554 = vpack.c.b16 %v553, %v553
      %vm555 = vcmask 1043456
      %v558 = vsel %vm555, %v541, %v550
      %v561 = vsel %vm555, %v551, %v554
      %vm562 = vsmask.f32 7424
      %v563 = vshrl.u32 %v558, 16
      %v565 = vshll.u32 %v558, 16
      %v567 = vrot.slane %v565, 1
      %v568 = vor.u32 %v563, %v567
      %v569 = vshll.u32 %v561, 16
      %v571 = vrot.slane %v569, 1
      %v572 = vsel %vm562, %v568, %v571
      %v573 = vshrl.u32 %v561, 16
      %v575 = vor.u32 %v573, %v571
      %vm578 = vcmask 1046528
      %v579 = vrot.slane %v558, 1
      %v580 = vrot.slane %v561, 1
      %v581 = vsel %vm578, %v579, %v580
      %v582 = vld [vmem:[%s504] sm:$0xf]
      %v583 = vld [vmem:[%s504 + $0x4] sm:$0xf]
      %v584 = vld [vmem:[%s504 + $0x8] sm:$0xf]
      %v585 = vld [vmem:[%s504 + $0xc] sm:$0xf]
      %v586 = vld [vmem:[%s504 + $0x10] sm:$0xf]
      %v587 = vld [vmem:[%s504 + $0x14] sm:$0xf]
      %v588 = vld [vmem:[%s504 + $0x18] sm:$0xf]
      %v589 = vld [vmem:[%s504 + $0x1c] sm:$0xf]
      %v590 = vld [vmem:[%s504 + $0x20] sm:$0xf]
      %v591 = vld [vmem:[%s504 + $0x24] sm:$0xf]
      %v592 = vld [vmem:[%s504 + $0x28] sm:$0xf]
      %v593 = vld [vmem:[%s504 + $0x2c] sm:$0xf]
      %v594 = vld [vmem:[%s504 + $0x30] sm:$0xf]
      %v595 = vld [vmem:[%s504 + $0x34] sm:$0xf]
      %v596 = vld [vmem:[%s504 + $0x38] sm:$0xf]
      %v597 = vld [vmem:[%s504 + $0x3c] sm:$0xf]
      %v598 = vld [vmem:[%s504 + $0x40] sm:$0xf]
      %v599 = vld [vmem:[%s504 + $0x44] sm:$0xf]
      %v600 = vld [vmem:[%s504 + $0x48] sm:$0xf]
      %v601 = vld [vmem:[%s504 + $0x4c] sm:$0xf]
      %v602 = vld [vmem:[%s504 + $0x50] sm:$0xf]
      %v603 = vld [vmem:[%s504 + $0x54] sm:$0xf]
      %v604 = vld [vmem:[%s504 + $0x58] sm:$0xf]
      %v605 = vld [vmem:[%s504 + $0x5c] sm:$0xf]
      %v606 = vld [vmem:[%s504 + $0x60] sm:$0xf]
      %v607 = vld [vmem:[%s504 + $0x64] sm:$0xf]
      %v608 = vld [vmem:[%s504 + $0x68] sm:$0xf]
      %v609 = vld [vmem:[%s504 + $0x6c] sm:$0xf]
      %v610 = vld [vmem:[%s504 + $0x70] sm:$0xf]
      %v611 = vld [vmem:[%s504 + $0x74] sm:$0xf]
      %v612 = vld [vmem:[%s504 + $0x78] sm:$0xf]
      %v613 = vld [vmem:[%s504 + $0x7c] sm:$0xf]
      %v614 = vld [vmem:[%s504 + $0x80] sm:$0xf]
      %v615 = vld [vmem:[%s504 + $0x84] sm:$0xf]
      %v616 = vld [vmem:[%s504 + $0x88] sm:$0xf]
      %v617 = vld [vmem:[%s504 + $0x8c] sm:$0xf]
      %v618 = vld [vmem:[%s504 + $0x90] sm:$0xf]
      %v619 = vld [vmem:[%s504 + $0x94] sm:$0xf]
      %v620 = vld [vmem:[%s504 + $0x98] sm:$0xf]
      %v621 = vld [vmem:[%s504 + $0x9c] sm:$0xf]
      %v622 = vld [vmem:[%s504 + $0xa0] sm:$0xf]
      %v623 = vld [vmem:[%s504 + $0xa4] sm:$0xf]
      %v624 = vld [vmem:[%s504 + $0xa8] sm:$0xf]
      %v625 = vld [vmem:[%s504 + $0xac] sm:$0xf]
      %v626 = vld [vmem:[%s504 + $0xb0] sm:$0xf]
      %v627 = vld [vmem:[%s504 + $0xb4] sm:$0xf]
      %v628 = vld [vmem:[%s504 + $0xb8] sm:$0xf]
      %v629 = vld [vmem:[%s504 + $0xbc] sm:$0xf]
      %v630 = vld [vmem:[%s516] sm:$0xf]
      %v631 = vld [vmem:[%s516 + $0x4] sm:$0xf]
      %v632 = vld [vmem:[%s521] sm:$0xf]
      %v633 = vld [vmem:[%s521 + $0x4] sm:$0xf]
      %v634 = vld [vmem:[%s521 + $0x8] sm:$0xf]
      %v635 = vld [vmem:[%s521 + $0xc] sm:$0xf]
      %v636 = vld [vmem:[%s521 + $0x10] sm:$0xf]
      %v637 = vld [vmem:[%s521 + $0x14] sm:$0xf]
      %v638 = vld [vmem:[%s521 + $0x18] sm:$0xf]
      %v639 = vld [vmem:[%s521 + $0x1c] sm:$0xf]
      %v640 = vld [vmem:[%s521 + $0x20] sm:$0xf]
      %v641 = vld [vmem:[%s521 + $0x24] sm:$0xf]
      %v642 = vld [vmem:[%s521 + $0x28] sm:$0xf]
      %v643 = vld [vmem:[%s521 + $0x2c] sm:$0xf]
      %v644 = vld [vmem:[%s521 + $0x30] sm:$0xf]
      %v645 = vld [vmem:[%s521 + $0x34] sm:$0xf]
      %v646 = vld [vmem:[%s521 + $0x38] sm:$0xf]
      %v647 = vld [vmem:[%s521 + $0x3c] sm:$0xf]
      %v650 = vunpack.c.l.b16 %v630
      %v651 = vunpack.c.l.b16 %v631
      %v652 = vpack.c.b16 %v651, %v650
      %v670 = vunpack.c.l.b16 %v632
      %v671 = vunpack.c.l.b16 %v633
      %v672 = vunpack.c.l.b16 %v634
      %v673 = vunpack.c.l.b16 %v635
      %v674 = vunpack.c.l.b16 %v636
      %v675 = vunpack.c.l.b16 %v637
      %v676 = vunpack.c.l.b16 %v638
      %v677 = vunpack.c.l.b16 %v639
      %v678 = vunpack.c.l.b16 %v640
      %v679 = vunpack.c.l.b16 %v641
      %v680 = vunpack.c.l.b16 %v642
      %v681 = vunpack.c.l.b16 %v643
      %v682 = vunpack.c.l.b16 %v644
      %v683 = vunpack.c.l.b16 %v645
      %v684 = vunpack.c.l.b16 %v646
      %v685 = vunpack.c.l.b16 %v647
      %v686 = vpack.c.b16 %v671, %v670
      %v687 = vpack.c.b16 %v673, %v672
      %v688 = vpack.c.b16 %v675, %v674
      %v689 = vpack.c.b16 %v677, %v676
      %v690 = vpack.c.b16 %v679, %v678
      %v691 = vpack.c.b16 %v681, %v680
      %v692 = vpack.c.b16 %v683, %v682
      %v693 = vpack.c.b16 %v685, %v684
      %702 = vmatprep.subr.bf16.mxu0 0
      %703 = vmatpush1.bf16.msra.mxu0 %v693
      %704 = vmatprep.subr.bf16.mxu0 0
      %705 = vmatpush1.bf16.msra.mxu0 %v692
      %706 = vmatprep.subr.bf16.mxu0 0
      %707 = vmatpush1.bf16.msra.mxu0 %v691
      %708 = vmatprep.subr.bf16.mxu0 0
      %709 = vmatpush1.bf16.msra.mxu0 %v690
      %710 = vmatprep.subr.bf16.mxu0 0
      %711 = vmatpush1.bf16.msra.mxu0 %v689
      %712 = vmatprep.subr.bf16.mxu0 0
      %713 = vmatpush1.bf16.msra.mxu0 %v688
      %714 = vmatprep.subr.bf16.mxu0 0
      %715 = vmatpush1.bf16.msra.mxu0 %v687
      %716 = vmatprep.subr.bf16.mxu0 0
      %717 = vmatpush1.bf16.msra.mxu0 %v686
      %718 = vmatprep.subr.bf16.mxu0 0
      %719 = vmatpush2.bf16.msra.mxu0 0
      %720 = vmatprep.subr.bf16.mxu0 0
      %721 = vmatpush2.bf16.msra.mxu0 0
      %722 = vmatprep.subr.bf16.mxu0 0
      %723 = vmatpush2.bf16.msra.mxu0 0
      %724 = vmatprep.subr.bf16.mxu0 0
      %725 = vmatpush2.bf16.msra.mxu0 0
      %726 = vmatprep.subr.bf16.mxu0 0
      %727 = vmatpush2.bf16.msra.mxu0 0
      %728 = vmatprep.subr.bf16.mxu0 0
      %729 = vmatpush2.bf16.msra.mxu0 0
      %730 = vmatprep.subr.bf16.mxu0 0
      %731 = vmatpush2.bf16.msra.mxu0 0
      %732 = vmatprep.subr.bf16.mxu0 0
      %733 = vmatpush2.bf16.msra.mxu0 0
      %734 = vmatprep.mubr.bf16.mxu0 0
      %735 = vmatmul.mubr.bf16.gmra.mxu0 %v652
      %v736 = vpop.f32.mrf.mxu0
      %v737 = vadd.f32 0.0, %v736
      %v738 = vpop.f32.mrf.mxu0
      %v739 = vpop.f32.mrf.mxu0
      %v740 = vadd.f32 0.0, %v739
      %v741 = vpop.f32.mrf.mxu0
      %742 = vdwg.mxu0
      %vm743 = vsmask.f32 4352
      %v744 = vrot.slane %v563, 3
      %v745 = vrot.slane %v565, 4
      %v746 = vor.u32 %v744, %v745
      %v747 = vrot.slane %v573, 3
      %v748 = vrot.slane %v569, 4
      %v749 = vor.u32 %v747, %v748
      %v750 = vsel %vm743, %v746, %v749
      %v752 = vshrl.u32 %v572, 16
      %v754 = vrot.slane %v752, 3
      %v755 = vshll.u32 %v572, 16
      %v757 = vrot.slane %v755, 4
      %v758 = vor.u32 %v754, %v757
      %v760 = vshrl.u32 %v575, 16
      %v762 = vrot.slane %v760, 3
      %v763 = vshll.u32 %v575, 16
      %v765 = vrot.slane %v763, 4
      %v766 = vor.u32 %v762, %v765
      %v767 = vsel %vm743, %v758, %v766
      %v769 = vshrl.u32 %v581, 16
      %v771 = vrot.slane %v769, 3
      %v772 = vshll.u32 %v581, 16
      %v774 = vrot.slane %v772, 4
      %v775 = vor.u32 %v771, %v774
      %v777 = vshrl.u32 %v580, 16
      %v779 = vrot.slane %v777, 3
      %v780 = vshll.u32 %v580, 16
      %v782 = vrot.slane %v780, 4
      %v783 = vor.u32 %v779, %v782
      %v784 = vsel %vm743, %v775, %v783
      %v836 = vunpack.c.l.b16 %v582
      %v837 = vunpack.c.l.b16 %v583
      %v838 = vunpack.c.l.b16 %v584
      %v839 = vunpack.c.l.b16 %v585
      %v840 = vunpack.c.l.b16 %v586
      %v841 = vunpack.c.l.b16 %v587
      %v842 = vunpack.c.l.b16 %v588
      %v843 = vunpack.c.l.b16 %v589
      %v844 = vunpack.c.l.b16 %v590
      %v845 = vunpack.c.l.b16 %v591
      %v846 = vunpack.c.l.b16 %v592
      %v847 = vunpack.c.l.b16 %v593
      %v848 = vunpack.c.l.b16 %v594
      %v849 = vunpack.c.l.b16 %v595
      %v850 = vunpack.c.l.b16 %v596
      %v851 = vunpack.c.l.b16 %v597
      %v852 = vunpack.c.l.b16 %v598
      %v853 = vunpack.c.l.b16 %v599
      %v854 = vunpack.c.l.b16 %v600
      %v855 = vunpack.c.l.b16 %v601
      %v856 = vunpack.c.l.b16 %v602
      %v857 = vunpack.c.l.b16 %v603
      %v858 = vunpack.c.l.b16 %v604
      %v859 = vunpack.c.l.b16 %v605
      %v860 = vunpack.c.l.b16 %v606
      %v861 = vunpack.c.l.b16 %v607
      %v862 = vunpack.c.l.b16 %v608
      %v863 = vunpack.c.l.b16 %v609
      %v864 = vunpack.c.l.b16 %v610
      %v865 = vunpack.c.l.b16 %v611
      %v866 = vunpack.c.l.b16 %v612
      %v867 = vunpack.c.l.b16 %v613
      %v868 = vunpack.c.l.b16 %v614
      %v869 = vunpack.c.l.b16 %v615
      %v870 = vunpack.c.l.b16 %v616
      %v871 = vunpack.c.l.b16 %v617
      %v872 = vunpack.c.l.b16 %v618
      %v873 = vunpack.c.l.b16 %v619
      %v874 = vunpack.c.l.b16 %v620
      %v875 = vunpack.c.l.b16 %v621
      %v876 = vunpack.c.l.b16 %v622
      %v877 = vunpack.c.l.b16 %v623
      %v878 = vunpack.c.l.b16 %v624
      %v879 = vunpack.c.l.b16 %v625
      %v880 = vunpack.c.l.b16 %v626
      %v881 = vunpack.c.l.b16 %v627
      %v882 = vunpack.c.l.b16 %v628
      %v883 = vunpack.c.l.b16 %v629
      %v884 = vpack.c.b16 %v837, %v836
      %v885 = vpack.c.b16 %v839, %v838
      %v886 = vpack.c.b16 %v841, %v840
      %v887 = vpack.c.b16 %v843, %v842
      %v888 = vpack.c.b16 %v845, %v844
      %v889 = vpack.c.b16 %v847, %v846
      %v890 = vpack.c.b16 %v849, %v848
      %v891 = vpack.c.b16 %v851, %v850
      %v892 = vpack.c.b16 %v853, %v852
      %v893 = vpack.c.b16 %v855, %v854
      %v894 = vpack.c.b16 %v857, %v856
      %v895 = vpack.c.b16 %v859, %v858
      %v896 = vpack.c.b16 %v861, %v860
      %v897 = vpack.c.b16 %v863, %v862
      %v898 = vpack.c.b16 %v865, %v864
      %v899 = vpack.c.b16 %v867, %v866
      %v900 = vpack.c.b16 %v869, %v868
      %v901 = vpack.c.b16 %v871, %v870
      %v902 = vpack.c.b16 %v873, %v872
      %v903 = vpack.c.b16 %v875, %v874
      %v904 = vpack.c.b16 %v877, %v876
      %v905 = vpack.c.b16 %v879, %v878
      %v906 = vpack.c.b16 %v881, %v880
      %v907 = vpack.c.b16 %v883, %v882
      %932 = vmatprep.subr.bf16.mxu0 0
      %933 = vmatpush1.bf16.msra.mxu0 %v891
      %934 = vmatprep.subr.bf16.mxu0 0
      %935 = vmatpush1.bf16.msra.mxu0 %v890
      %936 = vmatprep.subr.bf16.mxu0 0
      %937 = vmatpush1.bf16.msra.mxu0 %v889
      %938 = vmatprep.subr.bf16.mxu0 0
      %939 = vmatpush1.bf16.msra.mxu0 %v888
      %940 = vmatprep.subr.bf16.mxu0 0
      %941 = vmatpush1.bf16.msra.mxu0 %v887
      %942 = vmatprep.subr.bf16.mxu0 0
      %943 = vmatpush1.bf16.msra.mxu0 %v886
      %944 = vmatprep.subr.bf16.mxu0 0
      %945 = vmatpush1.bf16.msra.mxu0 %v885
      %946 = vmatprep.subr.bf16.mxu0 0
      %947 = vmatpush1.bf16.msra.mxu0 %v884
      %948 = vmatprep.subr.bf16.mxu0 0
      %949 = vmatpush2.bf16.msra.mxu0 %v899
      %950 = vmatprep.subr.bf16.mxu0 0
      %951 = vmatpush2.bf16.msra.mxu0 %v898
      %952 = vmatprep.subr.bf16.mxu0 0
      %953 = vmatpush2.bf16.msra.mxu0 %v897
      %954 = vmatprep.subr.bf16.mxu0 0
      %955 = vmatpush2.bf16.msra.mxu0 %v896
      %956 = vmatprep.subr.bf16.mxu0 0
      %957 = vmatpush2.bf16.msra.mxu0 %v895
      %958 = vmatprep.subr.bf16.mxu0 0
      %959 = vmatpush2.bf16.msra.mxu0 %v894
      %960 = vmatprep.subr.bf16.mxu0 0
      %961 = vmatpush2.bf16.msra.mxu0 %v893
      %962 = vmatprep.subr.bf16.mxu0 0
      %963 = vmatpush2.bf16.msra.mxu0 %v892
      %964 = vmatprep.mubr.bf16.mxu0 %v767
      %965 = vmatmul.mubr.bf16.gmra.mxu0 %v750
      %v966 = vpop.f32.mrf.mxu0
      %v967 = vadd.f32 %v737, %v966
      %v968 = vpop.f32.mrf.mxu0
      %v969 = vpop.f32.mrf.mxu0
      %v970 = vadd.f32 %v740, %v969
      %v971 = vpop.f32.mrf.mxu0
      %972 = vdwg.mxu0
      %973 = vmatprep.subr.bf16.mxu0 0
      %974 = vmatpush1.bf16.msra.mxu0 %v907
      %975 = vmatprep.subr.bf16.mxu0 0
      %976 = vmatpush1.bf16.msra.mxu0 %v906
      %977 = vmatprep.subr.bf16.mxu0 0
      %978 = vmatpush1.bf16.msra.mxu0 %v905
      %979 = vmatprep.subr.bf16.mxu0 0
      %980 = vmatpush1.bf16.msra.mxu0 %v904
      %981 = vmatprep.subr.bf16.mxu0 0
      %982 = vmatpush1.bf16.msra.mxu0 %v903
      %983 = vmatprep.subr.bf16.mxu0 0
      %984 = vmatpush1.bf16.msra.mxu0 %v902
      %985 = vmatprep.subr.bf16.mxu0 0
      %986 = vmatpush1.bf16.msra.mxu0 %v901
      %987 = vmatprep.subr.bf16.mxu0 0
      %988 = vmatpush1.bf16.msra.mxu0 %v900
      %989 = vmatprep.subr.bf16.mxu0 0
      %990 = vmatpush2.bf16.msra.mxu0 0
      %991 = vmatprep.subr.bf16.mxu0 0
      %992 = vmatpush2.bf16.msra.mxu0 0
      %993 = vmatprep.subr.bf16.mxu0 0
      %994 = vmatpush2.bf16.msra.mxu0 0
      %995 = vmatprep.subr.bf16.mxu0 0
      %996 = vmatpush2.bf16.msra.mxu0 0
      %997 = vmatprep.subr.bf16.mxu0 0
      %998 = vmatpush2.bf16.msra.mxu0 0
      %999 = vmatprep.subr.bf16.mxu0 0
      %1000 = vmatpush2.bf16.msra.mxu0 0
      %1001 = vmatprep.subr.bf16.mxu0 0
      %1002 = vmatpush2.bf16.msra.mxu0 0
      %1003 = vmatprep.subr.bf16.mxu0 0
      %1004 = vmatpush2.bf16.msra.mxu0 0
      %1005 = vmatprep.mubr.bf16.mxu0 0
      %1006 = vmatmul.mubr.bf16.gmra.mxu0 %v784
      %v1007 = vpop.f32.mrf.mxu0
      %v1008 = vadd.f32 %v967, %v1007
      %v1009 = vpop.f32.mrf.mxu0
      %v1010 = vpop.f32.mrf.mxu0
      %v1011 = vadd.f32 %v970, %v1010
      %v1012 = vpop.f32.mrf.mxu0
      %1013 = vdwg.mxu0
      %v1014 = vld [vmem:[%s507] sm:$0x1]
      %v1016 = vlaneseq
      %v1017 = vshrl.u32 %v1016, 7
      %v1018 = vsub.s32 0, %v1017
      %v1019 = vrot.slane %v1014, %v1018
      %v1021 = vadd.f32 %v1008, %v1019
      %v1022 = vadd.f32 %v1011, %v1019
      %v1023 = vmax.f32 %v1021, 0.0
      %v1024 = vmax.f32 %v1022, 0.0
      %v1025 = vpack.c.bf16 %v1024, %v1023
      %v1027 = vunpack.c.l.b16 %v1025
      %v1028 = vunpack.c.h.b16 %v1025
      %v1029 = vpack.c.b16 %v1027, %v1027
      %v1030 = vpack.c.b16 %v1028, %v1028
      %1033 = vst [vmem:[%s533] sm:$0xf] %v1029
      %1034 = vst [vmem:[%s533 + $0x4] sm:$0xf] %v1030
      %s1035 = smul.u32 2, %s25
      %p1036 = scmp.lt.s32.totalorder %s24, 1
      %s1037 = scalar_select %p1036, %s24, 1
      %p1038 = scmp.lt.s32.totalorder %s1035, 1
      %s1039 = scalar_select %p1038, %s1035, 1
      %p1040 = scmp.lt.s32.totalorder %s23, 0
      %s1041 = scalar_select %p1040, %s23, 0
      %s1042 = sadd.s32 %s1041, %s1039
      %s1043 = smul.addr %s1037, 2
      %s1044 = sadd.s32 %s1042, %s1043
      %s1045 = smul.addr %s1044, 4
      %s1046 = scalar_lea.vmem %s7, %s1045
      // Predicated region
      $region49: #{jasper_block.5} parent=47 // pred_check
        %p1047 = pneg %p265
      $region50: #{jasper_block.5} parent=47 // pred_check_branch
        %1049 = sbr.rel (%p1047) target = $region52
      $region51: #{jasper_block.5} parent=47 // pred_region
        %s1050 = smul.u32 2, %s25
      $region52: #{jasper_block.5} parent=47 // pred_fallthru
        _
    $region48: #{jasper_block.5} parent=5 // pred_fallthru
      _
    %p1051 = scmp.le.s32.totalorder 2, %s13
    // Predicated region
    $region53: #{jasper_block.5} parent=5 // pred_check
      %p1052 = pneg %p1051
    $region54: #{jasper_block.5} parent=5 // pred_check_branch
      %1054 = sbr.rel (%p1052) target = $region56
    $region55: #{jasper_block.5} parent=5 // pred_region
      %s1055 = ssub.s32 %s13, 2
      // Predicated region
      $region57: #{jasper_block.5} parent=55 // pred_check
        %p1056 = pneg %p271
      $region58: #{jasper_block.5} parent=55 // pred_check_branch
        %1058 = sbr.rel (%p1056) target = $region60
      $region59: #{jasper_block.5} parent=55 // pred_region
        %s1059 = smul.u32 2, %s28
        %p1060 = scmp.lt.s32.totalorder %s27, 1
        %s1061 = scalar_select %p1060, %s27, 1
        %p1062 = scmp.lt.s32.totalorder %s1059, 1
        %s1063 = scalar_select %p1062, %s1059, 1
        %p1064 = scmp.lt.s32.totalorder %s26, 0
        %s1065 = scalar_select %p1064, %s26, 0
        %s1066 = sadd.s32 %s1065, %s1063
        %s1067 = smul.addr %s1061, 2
        %s1068 = sadd.s32 %s1066, %s1067
        %s1069 = smul.addr %s1068, 4
        %s1070 = scalar_lea.vmem %s7, %s1069
      $region60: #{jasper_block.5} parent=55 // pred_fallthru
        _
    $region56: #{jasper_block.5} parent=5 // pred_fallthru
      _
  $region6: #{jasper_block.5} parent=0 // loop_footer
    %s17 = sadd.s32 1, %s13
  $region7: #{jasper_block.5} parent=0 // loop_footer_branch
    %12 = sbr.rel target = $region3
  $region8: #{jasper_block.5} parent=0 // loop_exit
    _

// kernel: jasper_block.3
$region0: #{jasper_block.3}
  #allocation0 [shape = 'u32[]', space=smem, size = 0x4, offset = 0x4, fixed_abs, tag = 'smem constant byte address 0x4 - core index']
  #allocation1 [shape = 'u32[144,128]{1,0:T(1,128)}', space=vmem, size = 0x12000, scoped, tag = 'internal scratch']
  %s0 = inlined_call_operand.vmem [shape: bf16[2,16,128], index: 0, kind: input, shape index: {}, may-alias: {0,1,2}]
  %s1 = inlined_call_operand.vmem [shape: bf16[2,16,128], index: 1, kind: input, shape index: {}, may-alias: {0,1,2}]
  %s2 = inlined_call_operand.vmem [shape: bf16[2,16,128], index: 2, kind: input, shape index: {}, may-alias: {0,1,2}]
  %s3 = inlined_call_operand.vmem [shape: bf16[384,128], index: 3, kind: input, shape index: {}]
  %s4 = inlined_call_operand.vmem [shape: f32[1,128], index: 4, kind: input, shape index: {}]
  %s5 = inlined_call_operand.vmem [shape: bf16[2,16,128], index: 5, kind: output, shape index: {}]
  %s6 = sld [smem:[#allocation0]]
  $region53: #{jasper_block.3} parent=0
    _
  %s8 = ssub.s32 1, %s6
  %s9 = scalar_select 0, %s8, %s6
  loop: start=0, step=1, limit=4
  $region2: #{jasper_block.3} parent=0 // loop_pre_header
    _
  $region3: #{jasper_block.3} parent=0 // loop_header
    %s11 = sphi 0, %s15
    %p12 = scmp.ge.s32.totalorder %s11, 4
    %s18 = sphi 0, %s37
    %s19 = sphi 0, %s33
    %s20 = sphi 0, %s29
    %s21 = sphi 0, %s18
    %s22 = sphi 0, %s19
    %s23 = sphi 0, %s20
    %s24 = sphi 0, %s21
    %s25 = sphi 0, %s22
    %s26 = sphi 0, %s23
    %s50 = sphi 0, %s52
    %s53 = sphi 0, %s50
    %s54 = sphi 0, %s53
    %s70 = sphi 0, %s54
    %s78 = sphi 0, %s80
    %s81 = sphi 0, %s78
    %s82 = sphi 0, %s81
    %s98 = sphi 0, %s82
    %s114 = sphi 0, %s116
    %s117 = sphi 0, %s114
    %s118 = sphi 0, %s117
    %s134 = sphi 0, %s118
    %s140 = sphi 0, %s142
    %s143 = sphi 0, %s140
    %s144 = sphi 0, %s143
    %s160 = sphi 0, %s144
    %s166 = sphi 0, %s168
    %s169 = sphi 0, %s166
    %s170 = sphi 0, %s169
    %s186 = sphi 0, %s170
    %s196 = sphi 0, %s198
    %s199 = sphi 0, %s196
    %s200 = sphi 0, %s199
    %s216 = sphi 0, %s200
  $region4: #{jasper_block.3} parent=0 // loop_header_branch
    %14 = sbr.rel (%p12) target = $region8
  $region5: #{jasper_block.3} parent=0 // loop_body
    %s16 = ssub.s32 %s11, 1
    %s17 = ssub.s32 %s11, 2
    %s27 = sadd.s32 1, %s20
    %p28 = scmp.ge.s32.totalorder %s27, 1
    %s29 = scalar_select %p28, 0, %s27
    %s30 = sadd.s32 1, %s19
    %s31 = scalar_select %p28, %s30, %s19
    %p32 = scmp.ge.s32.totalorder %s31, 2
    %s33 = scalar_select %p32, 0, %s31
    %s34 = sadd.s32 1, %s18
    %s35 = scalar_select %p32, %s34, %s18
    %p36 = scmp.ge.s32.totalorder %s35, 1
    %s37 = scalar_select %p36, 0, %s35
    %s38 = smul.u32 %s20, 2
    %s39 = ssub.s32 %s38, 1
    %p40 = scmp.gt.s32.totalorder %s39, 0
    %s41 = scalar_select %p40, %s39, 0
    %s42 = smul.u32 %s29, 2
    %s43 = ssub.s32 %s42, 1
    %p44 = scmp.gt.s32.totalorder %s43, 0
    %s45 = scalar_select %p44, %s43, 0
    %s46 = ssub.s32 %s19, %s33
    %s47 = ssub.s32 %s41, %s45
    %s48 = sor.u32 %s46, %s47
    %p49 = scmp.eq.s32.totalorder %s48, 0
    %s51 = sadd.s32 %s50, 1
    %s52 = scalar_select %p49, %s50, %s51
    %p55 = pneg %p49
    %p56 = scmp.eq.s32.totalorder %s11, 1
    %p57 = por %p55, %p56
    %p58 = scmp.ne.s32.totalorder %s50, %s53
    %p59 = scmp.eq.s32.totalorder %s11, 0
    %p60 = por %p58, %p59
    %p61 = scmp.ne.s32.totalorder %s50, %s53
    %p62 = scmp.eq.s32.totalorder %s16, 1
    %p63 = por %p61, %p62
    %p64 = scmp.ne.s32.totalorder %s53, %s54
    %p65 = scmp.eq.s32.totalorder %s16, 0
    %p66 = por %p64, %p65
    %p67 = scmp.ne.s32.totalorder %s53, %s54
    %p68 = scmp.eq.s32.totalorder %s17, 1
    %p69 = por %p67, %p68
    %p71 = scmp.ne.s32.totalorder %s54, %s70
    %p72 = scmp.eq.s32.totalorder %s17, 0
    %p73 = por %p71, %p72
    %s74 = ssub.s32 %s19, %s33
    %s75 = ssub.s32 %s20, %s29
    %s76 = sor.u32 %s74, %s75
    %p77 = scmp.eq.s32.totalorder %s76, 0
    %s79 = sadd.s32 %s78, 1
    %s80 = scalar_select %p77, %s78, %s79
    %p83 = pneg %p77
    %p84 = scmp.eq.s32.totalorder %s11, 1
    %p85 = por %p83, %p84
    %p86 = scmp.ne.s32.totalorder %s78, %s81
    %p87 = scmp.eq.s32.totalorder %s11, 0
    %p88 = por %p86, %p87
    %p89 = scmp.ne.s32.totalorder %s78, %s81
    %p90 = scmp.eq.s32.totalorder %s16, 1
    %p91 = por %p89, %p90
    %p92 = scmp.ne.s32.totalorder %s81, %s82
    %p93 = scmp.eq.s32.totalorder %s16, 0
    %p94 = por %p92, %p93
    %p95 = scmp.ne.s32.totalorder %s81, %s82
    %p96 = scmp.eq.s32.totalorder %s17, 1
    %p97 = por %p95, %p96
    %p99 = scmp.ne.s32.totalorder %s82, %s98
    %p100 = scmp.eq.s32.totalorder %s17, 0
    %p101 = por %p99, %p100
    %s102 = sadd.s32 %s20, 1
    %s103 = smul.u32 %s102, 2
    %p104 = scmp.lt.s32.totalorder %s103, 1
    %s105 = scalar_select %p104, %s103, 1
    %s106 = sadd.s32 %s29, 1
    %s107 = smul.u32 %s106, 2
    %p108 = scmp.lt.s32.totalorder %s107, 1
    %s109 = scalar_select %p108, %s107, 1
    %s110 = ssub.s32 %s19, %s33
    %s111 = ssub.s32 %s105, %s109
    %s112 = sor.u32 %s110, %s111
    %p113 = scmp.eq.s32.totalorder %s112, 0
    %s115 = sadd.s32 %s114, 1
    %s116 = scalar_select %p113, %s114, %s115
    %p119 = pneg %p113
    %p120 = scmp.eq.s32.totalorder %s11, 1
    %p121 = por %p119, %p120
    %p122 = scmp.ne.s32.totalorder %s114, %s117
    %p123 = scmp.eq.s32.totalorder %s11, 0
    %p124 = por %p122, %p123
    %p125 = scmp.ne.s32.totalorder %s114, %s117
    %p126 = scmp.eq.s32.totalorder %s16, 1
    %p127 = por %p125, %p126
    %p128 = scmp.ne.s32.totalorder %s117, %s118
    %p129 = scmp.eq.s32.totalorder %s16, 0
    %p130 = por %p128, %p129
    %p131 = scmp.ne.s32.totalorder %s117, %s118
    %p132 = scmp.eq.s32.totalorder %s17, 1
    %p133 = por %p131, %p132
    %p135 = scmp.ne.s32.totalorder %s118, %s134
    %p136 = scmp.eq.s32.totalorder %s17, 0
    %p137 = por %p135, %p136
    %s138 = ssub.s32 %s18, %s37
    %p139 = scmp.eq.s32.totalorder %s138, 0
    %s141 = sadd.s32 %s140, 1
    %s142 = scalar_select %p139, %s140, %s141
    %p145 = pneg %p139
    %p146 = scmp.eq.s32.totalorder %s11, 1
    %p147 = por %p145, %p146
    %p148 = scmp.ne.s32.totalorder %s140, %s143
    %p149 = scmp.eq.s32.totalorder %s11, 0
    %p150 = por %p148, %p149
    %p151 = scmp.ne.s32.totalorder %s140, %s143
    %p152 = scmp.eq.s32.totalorder %s16, 1
    %p153 = por %p151, %p152
    %p154 = scmp.ne.s32.totalorder %s143, %s144
    %p155 = scmp.eq.s32.totalorder %s16, 0
    %p156 = por %p154, %p155
    %p157 = scmp.ne.s32.totalorder %s143, %s144
    %p158 = scmp.eq.s32.totalorder %s17, 1
    %p159 = por %p157, %p158
    %p161 = scmp.ne.s32.totalorder %s144, %s160
    %p162 = scmp.eq.s32.totalorder %s17, 0
    %p163 = por %p161, %p162
    %s164 = ssub.s32 %s18, %s37
    %p165 = scmp.eq.s32.totalorder %s164, 0
    %s167 = sadd.s32 %s166, 1
    %s168 = scalar_select %p165, %s166, %s167
    %p171 = pneg %p165
    %p172 = scmp.eq.s32.totalorder %s11, 1
    %p173 = por %p171, %p172
    %p174 = scmp.ne.s32.totalorder %s166, %s169
    %p175 = scmp.eq.s32.totalorder %s11, 0
    %p176 = por %p174, %p175
    %p177 = scmp.ne.s32.totalorder %s166, %s169
    %p178 = scmp.eq.s32.totalorder %s16, 1
    %p179 = por %p177, %p178
    %p180 = scmp.ne.s32.totalorder %s169, %s170
    %p181 = scmp.eq.s32.totalorder %s16, 0
    %p182 = por %p180, %p181
    %p183 = scmp.ne.s32.totalorder %s169, %s170
    %p184 = scmp.eq.s32.totalorder %s17, 1
    %p185 = por %p183, %p184
    %p187 = scmp.ne.s32.totalorder %s170, %s186
    %p188 = scmp.eq.s32.totalorder %s17, 0
    %p189 = por %p187, %p188
    %s190 = ssub.s32 %s19, %s33
    %s191 = ssub.s32 %s20, %s29
    %s192 = sor.u32 %s190, %s191
    %s193 = ssub.s32 %s18, %s37
    %s194 = sor.u32 %s192, %s193
    %p195 = scmp.eq.s32.totalorder %s194, 0
    %s197 = sadd.s32 %s196, 1
    %s198 = scalar_select %p195, %s196, %s197
    %p201 = pneg %p195
    %p202 = scmp.eq.s32.totalorder %s11, 1
    %p203 = por %p201, %p202
    %p204 = scmp.ne.s32.totalorder %s196, %s199
    %p205 = scmp.eq.s32.totalorder %s11, 0
    %p206 = por %p204, %p205
    %p207 = scmp.ne.s32.totalorder %s196, %s199
    %p208 = scmp.eq.s32.totalorder %s16, 1
    %p209 = por %p207, %p208
    %p210 = scmp.ne.s32.totalorder %s199, %s200
    %p211 = scmp.eq.s32.totalorder %s16, 0
    %p212 = por %p210, %p211
    %p213 = scmp.ne.s32.totalorder %s199, %s200
    %p214 = scmp.eq.s32.totalorder %s17, 1
    %p215 = por %p213, %p214
    %p217 = scmp.ne.s32.totalorder %s200, %s216
    %p218 = scmp.eq.s32.totalorder %s17, 0
    %p219 = por %p217, %p218
    %p220 = scmp.le.s32.totalorder 1, %s11
    %p221 = scmp.lt.s32.totalorder %s11, 3
    %p222 = pnand %p220, %p221
    %p223 = pneg %p222
    // Predicated region
    $region9: #{jasper_block.3} parent=5 // pred_check
      _
    $region10: #{jasper_block.3} parent=5 // pred_check_branch
      %225 = sbr.rel (%p222) target = $region12
    $region11: #{jasper_block.3} parent=5 // pred_region
      %s226 = ssub.s32 %s11, 1
      // Predicated region
      $region13: #{jasper_block.3} parent=11 // pred_check
        %p227 = pneg %p156
      $region14: #{jasper_block.3} parent=11 // pred_check_branch
        %229 = sbr.rel (%p227) target = $region16
      $region15: #{jasper_block.3} parent=11 // pred_region
        %p230 = scmp.lt.s32.totalorder %s21, 0
        %s231 = scalar_select %p230, %s21, 0
        %s232 = smul.addr %s231, 4
        %s233 = scalar_lea.vmem %s3, %s232
      $region16: #{jasper_block.3} parent=11 // pred_fallthru
        _
      // Predicated region
      $region17: #{jasper_block.3} parent=11 // pred_check
        %p234 = pneg %p182
      $region18: #{jasper_block.3} parent=11 // pred_check_branch
        %236 = sbr.rel (%p234) target = $region20
      $region19: #{jasper_block.3} parent=11 // pred_region
        %p237 = scmp.lt.s32.totalorder %s21, 0
        %s238 = scalar_select %p237, %s21, 0
        %s239 = scalar_lea.vmem %s4, %s238
      $region20: #{jasper_block.3} parent=11 // pred_fallthru
        _
    $region12: #{jasper_block.3} parent=5 // pred_fallthru
      _
    %p240 = scmp.lt.s32.totalorder %s11, 2
    // Predicated region
    $region21: #{jasper_block.3} parent=5 // pred_check
      %p241 = pneg %p240
    $region22: #{jasper_block.3} parent=5 // pred_check_branch
      %243 = sbr.rel (%p241) target = $region24
    $region23: #{jasper_block.3} parent=5 // pred_region
      // Predicated region
      $region25: #{jasper_block.3} parent=23 // pred_check
        %p244 = pneg %p60
      $region26: #{jasper_block.3} parent=23 // pred_check_branch
        %246 = sbr.rel (%p244) target = $region28
      $region27: #{jasper_block.3} parent=23 // pred_region
        %s247 = smul.u32 %s20, 2
        %s248 = ssub.s32 %s247, 1
        %p249 = scmp.gt.s32.totalorder %s248, 0
        %s250 = scalar_select %p249, %s248, 0
        %p251 = scmp.lt.s32.totalorder %s19, 1
        %s252 = scalar_select %p251, %s19, 1
        %p253 = scmp.lt.s32.totalorder %s250, 1
        %s254 = scalar_select %p253, %s250, 1
        %s255 = smul.addr %s252, 2
        %s256 = sadd.s32 %s254, %s255
        %s257 = smul.addr %s256, 4
        %s258 = scalar_lea.vmem %s0, %s257
        %s259 = smul.u32 %s20, 2
        %s260 = ssub.s32 %s259, 1
        %p261 = scmp.gt.s32.totalorder %s260, 0
        %s262 = scalar_select %p261, %s260, 0
      $region28: #{jasper_block.3} parent=23 // pred_fallthru
        _
      // Predicated region
      $region29: #{jasper_block.3} parent=23 // pred_check
        %p263 = pneg %p88
      $region30: #{jasper_block.3} parent=23 // pred_check_branch
        %265 = sbr.rel (%p263) target = $region32
      $region31: #{jasper_block.3} parent=23 // pred_region
        %s266 = smul.u32 2, %s20
        %p267 = scmp.lt.s32.totalorder %s19, 1
        %s268 = scalar_select %p267, %s19, 1
        %p269 = scmp.lt.s32.totalorder %s266, 1
        %s270 = scalar_select %p269, %s266, 1
        %s271 = smul.addr %s268, 2
        %s272 = sadd.s32 %s270, %s271
        %s273 = smul.addr %s272, 4
        %s274 = scalar_lea.vmem %s1, %s273
        %s275 = smul.u32 2, %s20
      $region32: #{jasper_block.3} parent=23 // pred_fallthru
        _
      // Predicated region
      $region33: #{jasper_block.3} parent=23 // pred_check
        %p276 = pneg %p124
      $region34: #{jasper_block.3} parent=23 // pred_check_branch
        %278 = sbr.rel (%p276) target = $region36
      $region35: #{jasper_block.3} parent=23 // pred_region
        %s279 = sadd.s32 %s20, 1
        %s280 = smul.u32 %s279, 2
        %p281 = scmp.lt.s32.totalorder %s280, 1
        %s282 = scalar_select %p281, %s280, 1
        %p283 = scmp.lt.s32.totalorder %s19, 1
        %s284 = scalar_select %p283, %s19, 1
        %p285 = scmp.lt.s32.totalorder %s282, 1
        %s286 = scalar_select %p285, %s282, 1
        %s287 = smul.addr %s284, 2
        %s288 = sadd.s32 %s286, %s287
        %s289 = smul.addr %s288, 4
        %s290 = scalar_lea.vmem %s2, %s289
        %s291 = sadd.s32 %s20, 1
        %s292 = smul.u32 %s291, 2
        %p293 = scmp.lt.s32.totalorder %s292, 1
        %s294 = scalar_select %p293, %s292, 1
      $region36: #{jasper_block.3} parent=23 // pred_fallthru
        _
    $region24: #{jasper_block.3} parent=5 // pred_fallthru
      _
    %p295 = scmp.le.s32.totalorder 1, %s11
    %p296 = scmp.lt.s32.totalorder %s11, 3
    %p297 = pnand %p295, %p296
    %p298 = pneg %p297
    // Predicated region
    $region37: #{jasper_block.3} parent=5 // pred_check
      _
    $region38: #{jasper_block.3} parent=5 // pred_check_branch
      %300 = sbr.rel (%p297) target = $region40
    $region39: #{jasper_block.3} parent=5 // pred_region
      %s301 = ssub.s32 %s11, 1
      %s302 = smul.u32 %s23, 2
      %s303 = ssub.s32 %s302, 1
      %p304 = scmp.gt.s32.totalorder %s303, 0
      %s305 = scalar_select %p304, %s303, 0
      %p306 = scmp.lt.s32.totalorder %s22, 1
      %s307 = scalar_select %p306, %s22, 1
      %p308 = scmp.lt.s32.totalorder %s305, 1
      %s309 = scalar_select %p308, %s305, 1
      %s310 = smul.addr %s307, 2
      %s311 = sadd.s32 %s309, %s310
      %s312 = smul.addr %s311, 4
      %s313 = scalar_lea.vmem %s0, %s312
      %p314 = pneg %p66
      %p315 = pneg %p63
      %s316 = smul.u32 2, %s23
      %p317 = scmp.lt.s32.totalorder %s22, 1
      %s318 = scalar_select %p317, %s22, 1
      %p319 = scmp.lt.s32.totalorder %s316, 1
      %s320 = scalar_select %p319, %s316, 1
      %s321 = smul.addr %s318, 2
      %s322 = sadd.s32 %s320, %s321
      %s323 = smul.addr %s322, 4
      %s324 = scalar_lea.vmem %s1, %s323
      %p325 = pneg %p94
      %p326 = pneg %p91
      %s327 = sadd.s32 %s23, 1
      %s328 = smul.u32 %s327, 2
      %p329 = scmp.lt.s32.totalorder %s328, 1
      %s330 = scalar_select %p329, %s328, 1
      %p331 = scmp.lt.s32.totalorder %s22, 1
      %s332 = scalar_select %p331, %s22, 1
      %p333 = scmp.lt.s32.totalorder %s330, 1
      %s334 = scalar_select %p333, %s330, 1
      %s335 = smul.addr %s332, 2
      %s336 = sadd.s32 %s334, %s335
      %s337 = smul.addr %s336, 4
      %s338 = scalar_lea.vmem %s2, %s337
      %p339 = pneg %p130
      %p340 = pneg %p127
      %p341 = scmp.lt.s32.totalorder %s21, 0
      %s342 = scalar_select %p341, %s21, 0
      %s343 = smul.addr %s342, 4
      %s344 = scalar_lea.vmem %s3, %s343
      %p345 = pneg %p156
      %p346 = pneg %p153
      %p347 = scmp.lt.s32.totalorder %s21, 0
      %s348 = scalar_select %p347, %s21, 0
      %s349 = scalar_lea.vmem %s4, %s348
      %p350 = pneg %p182
      %p351 = pneg %p179
      %p352 = pneg %p212
      %p353 = pneg %p209
      %s354 = smul.u32 2, %s23
      %p355 = scmp.lt.s32.totalorder %s22, 1
      %s356 = scalar_select %p355, %s22, 1
      %p357 = scmp.lt.s32.totalorder %s354, 1
      %s358 = scalar_select %p357, %s354, 1
      %p359 = scmp.lt.s32.totalorder %s21, 0
      %s360 = scalar_select %p359, %s21, 0
      %s361 = sadd.s32 %s360, %s358
      %s362 = smul.addr %s356, 2
      %s363 = sadd.s32 %s361, %s362
      %s364 = smul.addr %s363, 4
      %s365 = scalar_lea.vmem %s5, %s364
      %s366 = smul.u32 %s23, 2
      %s367 = ssub.s32 %s366, 1
      %p368 = scmp.gt.s32.totalorder %s367, 0
      %s369 = scalar_select %p368, %s367, 0
      %p370 = scmp.lt.s32.totalorder %s22, 1
      %s371 = scalar_select %p370, %s22, 1
      %p372 = scmp.lt.s32.totalorder %s369, 1
      %s373 = scalar_select %p372, %s369, 1
      %s374 = smul.addr %s371, 2
      %s375 = sadd.s32 %s373, %s374
      %s376 = smul.addr %s375, 4
      %s377 = scalar_lea.vmem %s0, %s376
      %s378 = smul.u32 %s23, 2
      %s379 = ssub.s32 %s378, 1
      %p380 = scmp.gt.s32.totalorder %s379, 0
      %s381 = scalar_select %p380, %s379, 0
      %s382 = smul.u32 2, %s23
      %p383 = scmp.lt.s32.totalorder %s22, 1
      %s384 = scalar_select %p383, %s22, 1
      %p385 = scmp.lt.s32.totalorder %s382, 1
      %s386 = scalar_select %p385, %s382, 1
      %s387 = smul.addr %s384, 2
      %s388 = sadd.s32 %s386, %s387
      %s389 = smul.addr %s388, 4
      %s390 = scalar_lea.vmem %s1, %s389
      %s391 = smul.u32 2, %s23
      %s392 = sadd.s32 %s23, 1
      %s393 = smul.u32 %s392, 2
      %p394 = scmp.lt.s32.totalorder %s393, 1
      %s395 = scalar_select %p394, %s393, 1
      %p396 = scmp.lt.s32.totalorder %s22, 1
      %s397 = scalar_select %p396, %s22, 1
      %p398 = scmp.lt.s32.totalorder %s395, 1
      %s399 = scalar_select %p398, %s395, 1
      %s400 = smul.addr %s397, 2
      %s401 = sadd.s32 %s399, %s400
      %s402 = smul.addr %s401, 4
      %s403 = scalar_lea.vmem %s2, %s402
      %s404 = sadd.s32 %s23, 1
      %s405 = smul.u32 %s404, 2
      %p406 = scmp.lt.s32.totalorder %s405, 1
      %s407 = scalar_select %p406, %s405, 1
      %p408 = scmp.lt.s32.totalorder %s21, 0
      %s409 = scalar_select %p408, %s21, 0
      %s410 = smul.addr %s409, 4
      %s411 = scalar_lea.vmem %s3, %s410
      %p412 = scmp.lt.s32.totalorder %s21, 0
      %s413 = scalar_select %p412, %s21, 0
      %s414 = scalar_lea.vmem %s4, %s413
      %s415 = smul.u32 2, %s23
      %p416 = scmp.lt.s32.totalorder %s22, 1
      %s417 = scalar_select %p416, %s22, 1
      %p418 = scmp.lt.s32.totalorder %s415, 1
      %s419 = scalar_select %p418, %s415, 1
      %p420 = scmp.lt.s32.totalorder %s21, 0
      %s421 = scalar_select %p420, %s21, 0
      %s422 = sadd.s32 %s421, %s419
      %s423 = smul.addr %s417, 2
      %s424 = sadd.s32 %s422, %s423
      %s425 = smul.addr %s424, 4
      %s426 = scalar_lea.vmem %s5, %s425
      %s427 = smul.u32 2, %s23
      %p429 = scmp.eq.s32.totalorder %s23, 0
      %v430 = vld [vmem:[%s377] sm:$0xf]
      %s431 = scalar_select %p429, 1, 0
      %v432 = vstv %s431
      %vm433 = vcmp.eq.s32.totalorder %v432, 1
      %v434 = vsel %vm433, 0, %v430
      %v435 = vld [vmem:[%s403] sm:$0xf]
      %v436 = vsel %vm433, 0, %v435
      %v437 = vld [vmem:[%s390] sm:$0xf]
      %v438 = vld [vmem:[%s390 + $0x4] sm:$0xf]
      %v441 = vunpack.c.l.b16 %v437
      %v442 = vunpack.c.l.b16 %v438
      %v443 = vpack.c.b16 %v441, %v441
      %v444 = vpack.c.b16 %v442, %v442
      %v446 = vunpack.c.l.b16 %v436
      %v447 = vpack.c.b16 %v446, %v446
      %vm448 = vcmask 1043456
      %v451 = vsel %vm448, %v434, %v443
      %v454 = vsel %vm448, %v444, %v447
      %vm455 = vsmask.f32 7424
      %v456 = vshrl.u32 %v451, 16
      %v458 = vshll.u32 %v451, 16
      %v460 = vrot.slane %v458, 1
      %v461 = vor.u32 %v456, %v460
      %v462 = vshll.u32 %v454, 16
      %v464 = vrot.slane %v462, 1
      %v465 = vsel %vm455, %v461, %v464
      %v466 = vshrl.u32 %v454, 16
      %v468 = vor.u32 %v466, %v464
      %vm471 = vcmask 1046528
      %v472 = vrot.slane %v451, 1
      %v473 = vrot.slane %v454, 1
      %v474 = vsel %vm471, %v472, %v473
      %v475 = vld [vmem:[%s411] sm:$0xf]
      %v476 = vld [vmem:[%s411 + $0x4] sm:$0xf]
      %v477 = vld [vmem:[%s411 + $0x8] sm:$0xf]
      %v478 = vld [vmem:[%s411 + $0xc] sm:$0xf]
      %v479 = vld [vmem:[%s411 + $0x10] sm:$0xf]
      %v480 = vld [vmem:[%s411 + $0x14] sm:$0xf]
      %v481 = vld [vmem:[%s411 + $0x18] sm:$0xf]
      %v482 = vld [vmem:[%s411 + $0x1c] sm:$0xf]
      %v483 = vld [vmem:[%s411 + $0x20] sm:$0xf]
      %v484 = vld [vmem:[%s411 + $0x24] sm:$0xf]
      %v485 = vld [vmem:[%s411 + $0x28] sm:$0xf]
      %v486 = vld [vmem:[%s411 + $0x2c] sm:$0xf]
      %v487 = vld [vmem:[%s411 + $0x30] sm:$0xf]
      %v488 = vld [vmem:[%s411 + $0x34] sm:$0xf]
      %v489 = vld [vmem:[%s411 + $0x38] sm:$0xf]
      %v490 = vld [vmem:[%s411 + $0x3c] sm:$0xf]
      %v491 = vld [vmem:[%s411 + $0x40] sm:$0xf]
      %v492 = vld [vmem:[%s411 + $0x44] sm:$0xf]
      %v493 = vld [vmem:[%s411 + $0x48] sm:$0xf]
      %v494 = vld [vmem:[%s411 + $0x4c] sm:$0xf]
      %v495 = vld [vmem:[%s411 + $0x50] sm:$0xf]
      %v496 = vld [vmem:[%s411 + $0x54] sm:$0xf]
      %v497 = vld [vmem:[%s411 + $0x58] sm:$0xf]
      %v498 = vld [vmem:[%s411 + $0x5c] sm:$0xf]
      %v499 = vld [vmem:[%s411 + $0x60] sm:$0xf]
      %v500 = vld [vmem:[%s411 + $0x64] sm:$0xf]
      %v501 = vld [vmem:[%s411 + $0x68] sm:$0xf]
      %v502 = vld [vmem:[%s411 + $0x6c] sm:$0xf]
      %v503 = vld [vmem:[%s411 + $0x70] sm:$0xf]
      %v504 = vld [vmem:[%s411 + $0x74] sm:$0xf]
      %v505 = vld [vmem:[%s411 + $0x78] sm:$0xf]
      %v506 = vld [vmem:[%s411 + $0x7c] sm:$0xf]
      %v507 = vld [vmem:[%s411 + $0x80] sm:$0xf]
      %v508 = vld [vmem:[%s411 + $0x84] sm:$0xf]
      %v509 = vld [vmem:[%s411 + $0x88] sm:$0xf]
      %v510 = vld [vmem:[%s411 + $0x8c] sm:$0xf]
      %v511 = vld [vmem:[%s411 + $0x90] sm:$0xf]
      %v512 = vld [vmem:[%s411 + $0x94] sm:$0xf]
      %v513 = vld [vmem:[%s411 + $0x98] sm:$0xf]
      %v514 = vld [vmem:[%s411 + $0x9c] sm:$0xf]
      %v515 = vld [vmem:[%s411 + $0xa0] sm:$0xf]
      %v516 = vld [vmem:[%s411 + $0xa4] sm:$0xf]
      %v517 = vld [vmem:[%s411 + $0xa8] sm:$0xf]
      %v518 = vld [vmem:[%s411 + $0xac] sm:$0xf]
      %v519 = vld [vmem:[%s411 + $0xb0] sm:$0xf]
      %v520 = vld [vmem:[%s411 + $0xb4] sm:$0xf]
      %v521 = vld [vmem:[%s411 + $0xb8] sm:$0xf]
      %v522 = vld [vmem:[%s411 + $0xbc] sm:$0xf]
      %v523 = vld [vmem:[%s414] sm:$0x1]
      %v525 = vlaneseq
      %v526 = vshrl.u32 %v525, 7
      %v527 = vsub.s32 0, %v526
      %v528 = vrot.slane %v523, %v527
      %vm530 = vsmask.f32 4352
      %v531 = vrot.slane %v456, 3
      %v532 = vrot.slane %v458, 4
      %v533 = vor.u32 %v531, %v532
      %v534 = vrot.slane %v466, 3
      %v535 = vrot.slane %v462, 4
      %v536 = vor.u32 %v534, %v535
      %v537 = vsel %vm530, %v533, %v536
      %v539 = vshrl.u32 %v465, 16
      %v541 = vrot.slane %v539, 3
      %v542 = vshll.u32 %v465, 16
      %v544 = vrot.slane %v542, 4
      %v545 = vor.u32 %v541, %v544
      %v547 = vshrl.u32 %v468, 16
      %v549 = vrot.slane %v547, 3
      %v550 = vshll.u32 %v468, 16
      %v552 = vrot.slane %v550, 4
      %v553 = vor.u32 %v549, %v552
      %v554 = vsel %vm530, %v545, %v553
      %v556 = vshrl.u32 %v474, 16
      %v558 = vrot.slane %v556, 3
      %v559 = vshll.u32 %v474, 16
      %v561 = vrot.slane %v559, 4
      %v562 = vor.u32 %v558, %v561
      %v564 = vshrl.u32 %v473, 16
      %v566 = vrot.slane %v564, 3
      %v567 = vshll.u32 %v473, 16
      %v569 = vrot.slane %v567, 4
      %v570 = vor.u32 %v566, %v569
      %v571 = vsel %vm530, %v562, %v570
      %v623 = vunpack.c.l.b16 %v475
      %v624 = vunpack.c.l.b16 %v476
      %v625 = vunpack.c.l.b16 %v477
      %v626 = vunpack.c.l.b16 %v478
      %v627 = vunpack.c.l.b16 %v479
      %v628 = vunpack.c.l.b16 %v480
      %v629 = vunpack.c.l.b16 %v481
      %v630 = vunpack.c.l.b16 %v482
      %v631 = vunpack.c.l.b16 %v483
      %v632 = vunpack.c.l.b16 %v484
      %v633 = vunpack.c.l.b16 %v485
      %v634 = vunpack.c.l.b16 %v486
      %v635 = vunpack.c.l.b16 %v487
      %v636 = vunpack.c.l.b16 %v488
      %v637 = vunpack.c.l.b16 %v489
      %v638 = vunpack.c.l.b16 %v490
      %v639 = vunpack.c.l.b16 %v491
      %v640 = vunpack.c.l.b16 %v492
      %v641 = vunpack.c.l.b16 %v493
      %v642 = vunpack.c.l.b16 %v494
      %v643 = vunpack.c.l.b16 %v495
      %v644 = vunpack.c.l.b16 %v496
      %v645 = vunpack.c.l.b16 %v497
      %v646 = vunpack.c.l.b16 %v498
      %v647 = vunpack.c.l.b16 %v499
      %v648 = vunpack.c.l.b16 %v500
      %v649 = vunpack.c.l.b16 %v501
      %v650 = vunpack.c.l.b16 %v502
      %v651 = vunpack.c.l.b16 %v503
      %v652 = vunpack.c.l.b16 %v504
      %v653 = vunpack.c.l.b16 %v505
      %v654 = vunpack.c.l.b16 %v506
      %v655 = vunpack.c.l.b16 %v507
      %v656 = vunpack.c.l.b16 %v508
      %v657 = vunpack.c.l.b16 %v509
      %v658 = vunpack.c.l.b16 %v510
      %v659 = vunpack.c.l.b16 %v511
      %v660 = vunpack.c.l.b16 %v512
      %v661 = vunpack.c.l.b16 %v513
      %v662 = vunpack.c.l.b16 %v514
      %v663 = vunpack.c.l.b16 %v515
      %v664 = vunpack.c.l.b16 %v516
      %v665 = vunpack.c.l.b16 %v517
      %v666 = vunpack.c.l.b16 %v518
      %v667 = vunpack.c.l.b16 %v519
      %v668 = vunpack.c.l.b16 %v520
      %v669 = vunpack.c.l.b16 %v521
      %v670 = vunpack.c.l.b16 %v522
      %v671 = vpack.c.b16 %v624, %v623
      %v672 = vpack.c.b16 %v626, %v625
      %v673 = vpack.c.b16 %v628, %v627
      %v674 = vpack.c.b16 %v630, %v629
      %v675 = vpack.c.b16 %v632, %v631
      %v676 = vpack.c.b16 %v634, %v633
      %v677 = vpack.c.b16 %v636, %v635
      %v678 = vpack.c.b16 %v638, %v637
      %v679 = vpack.c.b16 %v640, %v639
      %v680 = vpack.c.b16 %v642, %v641
      %v681 = vpack.c.b16 %v644, %v643
      %v682 = vpack.c.b16 %v646, %v645
      %v683 = vpack.c.b16 %v648, %v647
      %v684 = vpack.c.b16 %v650, %v649
      %v685 = vpack.c.b16 %v652, %v651
      %v686 = vpack.c.b16 %v654, %v653
      %v687 = vpack.c.b16 %v656, %v655
      %v688 = vpack.c.b16 %v658, %v657
      %v689 = vpack.c.b16 %v660, %v659
      %v690 = vpack.c.b16 %v662, %v661
      %v691 = vpack.c.b16 %v664, %v663
      %v692 = vpack.c.b16 %v666, %v665
      %v693 = vpack.c.b16 %v668, %v667
      %v694 = vpack.c.b16 %v670, %v669
      %719 = vmatprep.subr.bf16.mxu0 0
      %720 = vmatpush1.bf16.msra.mxu0 %v678
      %721 = vmatprep.subr.bf16.mxu0 0
      %722 = vmatpush1.bf16.msra.mxu0 %v677
      %723 = vmatprep.subr.bf16.mxu0 0
      %724 = vmatpush1.bf16.msra.mxu0 %v676
      %725 = vmatprep.subr.bf16.mxu0 0
      %726 = vmatpush1.bf16.msra.mxu0 %v675
      %727 = vmatprep.subr.bf16.mxu0 0
      %728 = vmatpush1.bf16.msra.mxu0 %v674
      %729 = vmatprep.subr.bf16.mxu0 0
      %730 = vmatpush1.bf16.msra.mxu0 %v673
      %731 = vmatprep.subr.bf16.mxu0 0
      %732 = vmatpush1.bf16.msra.mxu0 %v672
      %733 = vmatprep.subr.bf16.mxu0 0
      %734 = vmatpush1.bf16.msra.mxu0 %v671
      %735 = vmatprep.subr.bf16.mxu0 0
      %736 = vmatpush2.bf16.msra.mxu0 %v686
      %737 = vmatprep.subr.bf16.mxu0 0
      %738 = vmatpush2.bf16.msra.mxu0 %v685
      %739 = vmatprep.subr.bf16.mxu0 0
      %740 = vmatpush2.bf16.msra.mxu0 %v684
      %741 = vmatprep.subr.bf16.mxu0 0
      %742 = vmatpush2.bf16.msra.mxu0 %v683
      %743 = vmatprep.subr.bf16.mxu0 0
      %744 = vmatpush2.bf16.msra.mxu0 %v682
      %745 = vmatprep.subr.bf16.mxu0 0
      %746 = vmatpush2.bf16.msra.mxu0 %v681
      %747 = vmatprep.subr.bf16.mxu0 0
      %748 = vmatpush2.bf16.msra.mxu0 %v680
      %749 = vmatprep.subr.bf16.mxu0 0
      %750 = vmatpush2.bf16.msra.mxu0 %v679
      %751 = vmatprep.mubr.bf16.mxu0 %v554
      %752 = vmatmul.mubr.bf16.gmra.mxu0 %v537
      %v753 = vpop.f32.mrf.mxu0
      %v754 = vadd.f32 %v528, %v753
      %v755 = vpop.f32.mrf.mxu0
      %v756 = vpop.f32.mrf.mxu0
      %v757 = vadd.f32 %v528, %v756
      %v758 = vpop.f32.mrf.mxu0
      %759 = vdwg.mxu0
      %760 = vmatprep.subr.bf16.mxu0 0
      %761 = vmatpush1.bf16.msra.mxu0 %v694
      %762 = vmatprep.subr.bf16.mxu0 0
      %763 = vmatpush1.bf16.msra.mxu0 %v693
      %764 = vmatprep.subr.bf16.mxu0 0
      %765 = vmatpush1.bf16.msra.mxu0 %v692
      %766 = vmatprep.subr.bf16.mxu0 0
      %767 = vmatpush1.bf16.msra.mxu0 %v691
      %768 = vmatprep.subr.bf16.mxu0 0
      %769 = vmatpush1.bf16.msra.mxu0 %v690
      %770 = vmatprep.subr.bf16.mxu0 0
      %771 = vmatpush1.bf16.msra.mxu0 %v689
      %772 = vmatprep.subr.bf16.mxu0 0
      %773 = vmatpush1.bf16.msra.mxu0 %v688
      %774 = vmatprep.subr.bf16.mxu0 0
      %775 = vmatpush1.bf16.msra.mxu0 %v687
      %776 = vmatprep.subr.bf16.mxu0 0
      %777 = vmatpush2.bf16.msra.mxu0 0
      %778 = vmatprep.subr.bf16.mxu0 0
      %779 = vmatpush2.bf16.msra.mxu0 0
      %780 = vmatprep.subr.bf16.mxu0 0
      %781 = vmatpush2.bf16.msra.mxu0 0
      %782 = vmatprep.subr.bf16.mxu0 0
      %783 = vmatpush2.bf16.msra.mxu0 0
      %784 = vmatprep.subr.bf16.mxu0 0
      %785 = vmatpush2.bf16.msra.mxu0 0
      %786 = vmatprep.subr.bf16.mxu0 0
      %787 = vmatpush2.bf16.msra.mxu0 0
      %788 = vmatprep.subr.bf16.mxu0 0
      %789 = vmatpush2.bf16.msra.mxu0 0
      %790 = vmatprep.subr.bf16.mxu0 0
      %791 = vmatpush2.bf16.msra.mxu0 0
      %792 = vmatprep.mubr.bf16.mxu0 0
      %793 = vmatmul.mubr.bf16.gmra.mxu0 %v571
      %v794 = vpop.f32.mrf.mxu0
      %v795 = vadd.f32 %v754, %v794
      %v796 = vpop.f32.mrf.mxu0
      %v797 = vpop.f32.mrf.mxu0
      %v798 = vadd.f32 %v757, %v797
      %v799 = vpop.f32.mrf.mxu0
      %800 = vdwg.mxu0
      %v801 = vmax.f32 %v795, 0.0
      %v802 = vmax.f32 %v798, 0.0
      %v803 = vpack.c.bf16 %v802, %v801
      %v805 = vunpack.c.l.b16 %v803
      %v806 = vunpack.c.h.b16 %v803
      %v807 = vpack.c.b16 %v805, %v805
      %v808 = vpack.c.b16 %v806, %v806
      %811 = vst [vmem:[%s426] sm:$0xf] %v807
      %812 = vst [vmem:[%s426 + $0x4] sm:$0xf] %v808
      %s813 = smul.u32 2, %s23
      %p814 = scmp.lt.s32.totalorder %s22, 1
      %s815 = scalar_select %p814, %s22, 1
      %p816 = scmp.lt.s32.totalorder %s813, 1
      %s817 = scalar_select %p816, %s813, 1
      %p818 = scmp.lt.s32.totalorder %s21, 0
      %s819 = scalar_select %p818, %s21, 0
      %s820 = sadd.s32 %s819, %s817
      %s821 = smul.addr %s815, 2
      %s822 = sadd.s32 %s820, %s821
      %s823 = smul.addr %s822, 4
      %s824 = scalar_lea.vmem %s5, %s823
      // Predicated region
      $region41: #{jasper_block.3} parent=39 // pred_check
        %p825 = pneg %p209
      $region42: #{jasper_block.3} parent=39 // pred_check_branch
        %827 = sbr.rel (%p825) target = $region44
      $region43: #{jasper_block.3} parent=39 // pred_region
        %s828 = smul.u32 2, %s23
      $region44: #{jasper_block.3} parent=39 // pred_fallthru
        _
    $region40: #{jasper_block.3} parent=5 // pred_fallthru
      _
    %p829 = scmp.le.s32.totalorder 2, %s11
    // Predicated region
    $region45: #{jasper_block.3} parent=5 // pred_check
      %p830 = pneg %p829
    $region46: #{jasper_block.3} parent=5 // pred_check_branch
      %832 = sbr.rel (%p830) target = $region48
    $region47: #{jasper_block.3} parent=5 // pred_region
      %s833 = ssub.s32 %s11, 2
      // Predicated region
      $region49: #{jasper_block.3} parent=47 // pred_check
        %p834 = pneg %p215
      $region50: #{jasper_block.3} parent=47 // pred_check_branch
        %836 = sbr.rel (%p834) target = $region52
      $region51: #{jasper_block.3} parent=47 // pred_region
        %s837 = smul.u32 2, %s26
        %p838 = scmp.lt.s32.totalorder %s25, 1
        %s839 = scalar_select %p838, %s25, 1
        %p840 = scmp.lt.s32.totalorder %s837, 1
        %s841 = scalar_select %p840, %s837, 1
        %p842 = scmp.lt.s32.totalorder %s24, 0
        %s843 = scalar_select %p842, %s24, 0
        %s844 = sadd.s32 %s843, %s841
        %s845 = smul.addr %s839, 2
        %s846 = sadd.s32 %s844, %s845
        %s847 = smul.addr %s846, 4
        %s848 = scalar_lea.vmem %s5, %s847
      $region52: #{jasper_block.3} parent=47 // pred_fallthru
        _
    $region48: #{jasper_block.3} parent=5 // pred_fallthru
      _
  $region6: #{jasper_block.3} parent=0 // loop_footer
    %s15 = sadd.s32 1, %s11
  $region7: #{jasper_block.3} parent=0 // loop_footer_branch
    %10 = sbr.rel target = $region3
  $region8: #{jasper_block.3} parent=0 // loop_exit
    _

</llo_original>
